<compile_context>
chip_gen: v5e
topology: v5e:2x2
jax: 0.10.0
libtpu: 0.0.40
codegen_flags: <defaults>
</compile_context>

<pallas_src>
import numpy as np
import jax
import jax.numpy as jnp
from jax import lax
from jax.experimental import pallas as pl
from jax.experimental.pallas import tpu as pltpu

EPS = 1e-5  # nn.GroupNorm default eps


def make_kernel(H, W, Cin, Cout, G, has_res_conv):
    HW = H * W

    def group_norm(xf, gamma, beta, C):
        # xf: [C, HW]; gamma/beta: [C, 1].  Per-group stats via static slices,
        # single traversal: E[x] and E[x^2] reduced in one pass (f32).
        cpg = C // G
        inv_n = 1.0 / float(cpg * HW)
        outs = []
        for g in range(G):
            sl = xf[g * cpg:(g + 1) * cpg, :]                   # [cpg, HW]
            m = jnp.sum(sl, keepdims=True) * inv_n              # [1, 1]
            ex2 = jnp.sum(sl * sl, keepdims=True) * inv_n       # [1, 1]
            v = ex2 - m * m
            outs.append((sl - m) * lax.rsqrt(v + EPS))
        xn = outs[0] if G == 1 else jnp.concatenate(outs, axis=0)
        return xn * gamma + beta

    def silu(v):
        return v * jax.nn.sigmoid(v)

    def conv3x3_acc(h, w_ref, bias, masks):
        # h: [Ci, HW] f32; w_ref: [9, Co, Ci] bf16; bias: [Co, 1]; masks: [9, HW].
        # Per-tap accumulation: acc += w[k] @ (rolled + border-masked tap).
        # Only one shifted tap is live at a time; MXU operands bf16, acc f32.
        acc = None
        for k in range(9):
            oy, ox = k // 3 - 1, k % 3 - 1
            off = oy * W + ox
            # shifted[:, p] = h[:, p + off] (mod HW); wrap pixels are masked off.
            s = pltpu.roll(h, (-off) % HW, axis=1) if off != 0 else h
            if (oy, ox) != (0, 0):
                s = s * masks[k:k + 1, :]
            part = jnp.dot(w_ref[k], s.astype(jnp.bfloat16),
                           preferred_element_type=jnp.float32)
            acc = part if acc is None else acc + part
        return acc + bias

    def kernel(x_ref, t_ref, masks_ref, wt_ref, bt_ref,
               g1_ref, bb1_ref, w1_ref, cb1_ref,
               g2_ref, bb2_ref, w2_ref, cb2_ref,
               *res_refs):
        if has_res_conv:
            wr_ref, br_ref, o_ref = res_refs
        else:
            (o_ref,) = res_refs

        xf = x_ref[0].astype(jnp.float32)            # [Cin, HW]
        masks = masks_ref[...]                       # [9, HW], host-precomputed

        # GroupNorm 1 + SiLU (f32 VPU/EUP)
        h = silu(group_norm(xf, g1_ref[...], bb1_ref[...], Cin))

        # Conv 1 (3x3 'same'), per-tap accumulated MXU matmuls
        acc = conv3x3_acc(h, w1_ref, cb1_ref[...], masks)       # [Cout, HW] f32

        # time_expand Linear for this batch row: VPU multiply + lane reduce (f32)
        te = jnp.sum(wt_ref[...] * t_ref[0], axis=1, keepdims=True) + bt_ref[...]
        acc = acc + te                                           # broadcast [Cout,1]

        # GroupNorm 2 + SiLU
        h2 = silu(group_norm(acc, g2_ref[...], bb2_ref[...], Cout))

        # Conv 2 (3x3 'same'); 1x1-conv residual fused into the same accumulator
        acc2 = conv3x3_acc(h2, w2_ref, cb2_ref[...], masks)      # [Cout, HW] f32
        if has_res_conv:
            acc2 = acc2 + jnp.dot(wr_ref[...], xf.astype(jnp.bfloat16),
                                  preferred_element_type=jnp.float32) + br_ref[...]
        else:
            acc2 = acc2 + xf                                     # identity residual

        o_ref[0] = acc2.astype(o_ref.dtype)          # lane-dense store

    return kernel


def residual_block_pallas(x_nchw, time_emb, p, G):
    B, Cin, H, W = x_nchw.shape
    Cout, T = p["wt_torch"].shape
    HW = H * W
    assert Cin % G == 0 and Cout % G == 0, "channels must be divisible by groups"

    has_res_conv = p["w_res"] is not None

    x_flat = x_nchw.reshape(B, Cin, HW)              # free reshape (NCHW already)
    t3 = time_emb.reshape(B, 1, T)

    # Host-precomputed border masks: one [HW] row per 3x3 tap (center unused).
    pos = np.arange(HW)
    row, col = pos // W, pos % W
    masks_np = np.ones((9, HW), np.float32)
    for k in range(9):
        oy, ox = k // 3 - 1, k % 3 - 1
        valid = (row + oy >= 0) & (row + oy < H) & (col + ox >= 0) & (col + ox < W)
        masks_np[k] = valid.astype(np.float32)
    masks = jnp.asarray(masks_np)

    kernel = make_kernel(H, W, Cin, Cout, G, has_res_conv)

    def const_spec(shape):
        n = len(shape)
        return pl.BlockSpec(shape, lambda b, _n=n: (0,) * _n)

    col_v = lambda v: v.reshape(-1, 1)

    inputs = [
        x_flat,                                      # (B, Cin, HW)
        t3,                                          # (B, 1, T)
        masks,                                       # (9, HW)
        p["wt_torch"], col_v(p["bt"]),               # time_expand
        col_v(p["g1"]), col_v(p["b1"]),              # groupnorm_1
        p["w1_t"], col_v(p["cb1"]),                  # conv_1 (tap-major, bf16)
        col_v(p["g2"]), col_v(p["b2"]),              # groupnorm_2
        p["w2_t"], col_v(p["cb2"]),                  # conv_2 (tap-major, bf16)
    ]
    in_specs = [
        pl.BlockSpec((1, Cin, HW), lambda b: (b, 0, 0)),
        pl.BlockSpec((1, 1, T), lambda b: (b, 0, 0)),
        const_spec((9, HW)),
        const_spec((Cout, T)), const_spec((Cout, 1)),
        const_spec((Cin, 1)), const_spec((Cin, 1)),
        const_spec((9, Cout, Cin)), const_spec((Cout, 1)),
        const_spec((Cout, 1)), const_spec((Cout, 1)),
        const_spec((9, Cout, Cout)), const_spec((Cout, 1)),
    ]
    if has_res_conv:
        inputs += [p["wr"], col_v(p["br"])]
        in_specs += [const_spec((Cout, Cin)), const_spec((Cout, 1))]

    out = pl.pallas_call(
        kernel,
        out_shape=jax.ShapeDtypeStruct((B, Cout, HW), jnp.float32),
        grid=(B,),
        in_specs=in_specs,
        out_specs=pl.BlockSpec((1, Cout, HW), lambda b: (b, 0, 0)),
        compiler_params=pltpu.CompilerParams(
            dimension_semantics=("parallel",),       # batch shards across TCs
            vmem_limit_bytes=32 * 1024 * 1024),      # above v5e's 16 MiB default
    )(*inputs)

    return out.reshape(B, Cout, H, W)                # free reshape back to NCHW


def init_params(key, Cin, Cout, T):
    ks = jax.random.split(key, 12)
    rnd = lambda k, s, sc=0.1: jax.random.normal(k, s, jnp.float32) * sc
    p = {}
    # PyTorch-shaped parameters (used by the reference)
    p["wt_torch"] = rnd(ks[0], (Cout, T))            # nn.Linear weight [out, in]
    p["bt"] = rnd(ks[1], (Cout,))
    p["g1"] = 1.0 + rnd(ks[2], (Cin,), 0.05)
    p["b1"] = rnd(ks[3], (Cin,))
    p["w1"] = rnd(ks[4], (Cout, Cin, 3, 3))          # OIHW
    p["cb1"] = rnd(ks[5], (Cout,))
    p["g2"] = 1.0 + rnd(ks[6], (Cout,), 0.05)
    p["b2"] = rnd(ks[7], (Cout,))
    p["w2"] = rnd(ks[8], (Cout, Cout, 3, 3))         # OIHW
    p["cb2"] = rnd(ks[9], (Cout,))
    if Cin != Cout:
        p["w_res"] = rnd(ks[10], (Cout, Cin, 1, 1))  # OIHW 1x1
        p["br"] = rnd(ks[11], (Cout,))
    else:
        p["w_res"] = None
        p["br"] = jnp.zeros((Cout,), jnp.float32)
    # Kernel-layout parameters: tap-major [9, Cout, Ci], bf16 MXU operands.
    p["w1_t"] = jnp.transpose(p["w1"], (2, 3, 0, 1)).reshape(9, Cout, Cin).astype(jnp.bfloat16)
    p["w2_t"] = jnp.transpose(p["w2"], (2, 3, 0, 1)).reshape(9, Cout, Cout).astype(jnp.bfloat16)
    p["wr"] = (p["w_res"][:, :, 0, 0].astype(jnp.bfloat16) if Cin != Cout else None)
    return p


def ref_forward(x, t, p, G):
    # Pure-JAX NCHW f32 reference mirroring the PyTorch module exactly.
    def gn(v, gamma, beta):
        B, C, H, W = v.shape
        vg = v.reshape(B, G, -1)
        m = vg.mean(-1, keepdims=True)
        var = ((vg - m) ** 2).mean(-1, keepdims=True)
        vn = ((vg - m) / jnp.sqrt(var + EPS)).reshape(B, C, H, W)
        return vn * gamma.reshape(1, C, 1, 1) + beta.reshape(1, C, 1, 1)

    def conv(v, w, b):
        y = lax.conv_general_dilated(v, w, (1, 1), "SAME",
                                     dimension_numbers=("NCHW", "OIHW", "NCHW"))
        return y + b.reshape(1, -1, 1, 1)

    silu = lambda v: v * jax.nn.sigmoid(v)
    residual = x
    te = t @ p["wt_torch"].T + p["bt"]
    h = conv(silu(gn(x, p["g1"], p["b1"])), p["w1"], p["cb1"])
    h = h + te[:, :, None, None]
    h = conv(silu(gn(h, p["g2"], p["b2"])), p["w2"], p["cb2"])
    if p["w_res"] is not None:
        residual = conv(residual, p["w_res"], p["br"])
    return h + residual


if __name__ == "__main__":
    B, Cin, Cout, H, W, G, T = 2, 4, 8, 16, 16, 2, 32
    key = jax.random.PRNGKey(0)
    kx, kt, kp = jax.random.split(key, 3)
    x = jax.random.normal(kx, (B, Cin, H, W), jnp.float32)
    t_emb = jax.random.normal(kt, (B, T), jnp.float32)
    params = init_params(kp, Cin, Cout, T)

    out = residual_block_pallas(x, t_emb, params, G)
    out = jax.block_until_ready(out)
    assert out.shape == (B, Cout, H, W)
    ref = ref_forward(x, t_emb, params, G)
    # bf16 MXU operands (f32 accumulation) -> tolerance loosened accordingly.
    np.testing.assert_allclose(np.asarray(out), np.asarray(ref), atol=5e-2, rtol=5e-2)

    # Identity-residual path (Cin == Cout): 1x1 residual matmul statically skipped.
    params2 = init_params(jax.random.PRNGKey(1), Cout, Cout, T)
    x2 = jax.random.normal(jax.random.PRNGKey(2), (B, Cout, H, W), jnp.float32)
    out2 = jax.block_until_ready(residual_block_pallas(x2, t_emb, params2, G))
    ref2 = ref_forward(x2, t_emb, params2, G)
    np.testing.assert_allclose(np.asarray(out2), np.asarray(ref2), atol=5e-2, rtol=5e-2)

    print("KERNEL_OK")
</pallas_src>

<mosaic_0001>
module attributes {stable_mosaic.version = 11 : i64} {
  func.func @kernel(%arg0: i32, %arg1: memref<1x4x256xf32, #tpu.memory_space<vmem>>, %arg2: memref<1x1x32xf32, #tpu.memory_space<vmem>>, %arg3: memref<9x256xf32, #tpu.memory_space<vmem>>, %arg4: memref<8x32xf32, #tpu.memory_space<vmem>>, %arg5: memref<8x1xf32, #tpu.memory_space<vmem>>, %arg6: memref<4x1xf32, #tpu.memory_space<vmem>>, %arg7: memref<4x1xf32, #tpu.memory_space<vmem>>, %arg8: memref<9x8x4xbf16, #tpu.memory_space<vmem>>, %arg9: memref<8x1xf32, #tpu.memory_space<vmem>>, %arg10: memref<8x1xf32, #tpu.memory_space<vmem>>, %arg11: memref<8x1xf32, #tpu.memory_space<vmem>>, %arg12: memref<9x8x8xbf16, #tpu.memory_space<vmem>>, %arg13: memref<8x1xf32, #tpu.memory_space<vmem>>, %arg14: memref<8x4xbf16, #tpu.memory_space<vmem>>, %arg15: memref<8x1xf32, #tpu.memory_space<vmem>>, %arg16: memref<1x8x256xf32, #tpu.memory_space<vmem>>) attributes {dimension_semantics = [#tpu.dimension_semantics<parallel>], iteration_bounds = array<i64: 2>, scalar_prefetch = 0 : i64, scratch_operands = 0 : i64, tpu.core_type = #tpu.core_type<tc>, window_params = [{transform_indices = @transform_0, window_bounds = array<i64: 1, 4, 256>}, {transform_indices = @transform_1, window_bounds = array<i64: 1, 1, 32>}, {pipeline_mode = #tpu.pipeline_mode<synchronous>, transform_indices = @transform_2, window_bounds = array<i64: 9, 256>}, {pipeline_mode = #tpu.pipeline_mode<synchronous>, transform_indices = @transform_3, window_bounds = array<i64: 8, 32>}, {pipeline_mode = #tpu.pipeline_mode<synchronous>, transform_indices = @transform_4, window_bounds = array<i64: 8, 1>}, {pipeline_mode = #tpu.pipeline_mode<synchronous>, transform_indices = @transform_5, window_bounds = array<i64: 4, 1>}, {pipeline_mode = #tpu.pipeline_mode<synchronous>, transform_indices = @transform_6, window_bounds = array<i64: 4, 1>}, {pipeline_mode = #tpu.pipeline_mode<synchronous>, transform_indices = @transform_7, window_bounds = array<i64: 9, 8, 4>}, {pipeline_mode = #tpu.pipeline_mode<synchronous>, transform_indices = @transform_8, window_bounds = array<i64: 8, 1>}, {pipeline_mode = #tpu.pipeline_mode<synchronous>, transform_indices = @transform_9, window_bounds = array<i64: 8, 1>}, {pipeline_mode = #tpu.pipeline_mode<synchronous>, transform_indices = @transform_10, window_bounds = array<i64: 8, 1>}, {pipeline_mode = #tpu.pipeline_mode<synchronous>, transform_indices = @transform_11, window_bounds = array<i64: 9, 8, 8>}, {pipeline_mode = #tpu.pipeline_mode<synchronous>, transform_indices = @transform_12, window_bounds = array<i64: 8, 1>}, {pipeline_mode = #tpu.pipeline_mode<synchronous>, transform_indices = @transform_13, window_bounds = array<i64: 8, 4>}, {pipeline_mode = #tpu.pipeline_mode<synchronous>, transform_indices = @transform_14, window_bounds = array<i64: 8, 1>}, {transform_indices = @transform_15, window_bounds = array<i64: 1, 8, 256>}]} {
    %c0 = arith.constant 0 : index
    %c0_0 = arith.constant 0 : index
    %c0_1 = arith.constant 0 : index
    %0 = vector.load %arg1[%c0, %c0_0, %c0_1] : memref<1x4x256xf32, #tpu.memory_space<vmem>>, vector<1x4x256xf32>
    %1 = vector.shape_cast %0 : vector<1x4x256xf32> to vector<4x256xf32>
    %c0_2 = arith.constant 0 : index
    %c0_3 = arith.constant 0 : index
    %2 = vector.load %arg3[%c0_2, %c0_3] : memref<9x256xf32, #tpu.memory_space<vmem>>, vector<9x256xf32>
    %c0_4 = arith.constant 0 : index
    %c0_5 = arith.constant 0 : index
    %3 = vector.load %arg6[%c0_4, %c0_5] : memref<4x1xf32, #tpu.memory_space<vmem>>, vector<4x1xf32>
    %c0_6 = arith.constant 0 : index
    %c0_7 = arith.constant 0 : index
    %4 = vector.load %arg7[%c0_6, %c0_7] : memref<4x1xf32, #tpu.memory_space<vmem>>, vector<4x1xf32>
    %5 = vector.extract_strided_slice %1 {offsets = [0, 0], sizes = [2, 256], strides = [1, 1]} : vector<4x256xf32> to vector<2x256xf32>
    %6 = vector.shape_cast %5 : vector<2x256xf32> to vector<1x2x256xf32>
    %cst = arith.constant dense<0.000000e+00> : vector<1xf32>
    %7 = vector.multi_reduction <add>, %6, %cst [1, 2] : vector<1x2x256xf32> to vector<1xf32>
    %8 = vector.shape_cast %7 : vector<1xf32> to vector<1x1x1xf32>
    %9 = vector.extract %8[0, 0, 0] : f32 from vector<1x1x1xf32>
    %10 = vector.broadcast %9 : f32 to vector<1x1xf32>
    %cst_8 = arith.constant 0.001953125 : f32
    %11 = vector.broadcast %cst_8 : f32 to vector<1x1xf32>
    %12 = arith.mulf %10, %11 : vector<1x1xf32>
    %13 = arith.mulf %5, %5 : vector<2x256xf32>
    %14 = vector.shape_cast %13 : vector<2x256xf32> to vector<1x2x256xf32>
    %cst_9 = arith.constant dense<0.000000e+00> : vector<1xf32>
    %15 = vector.multi_reduction <add>, %14, %cst_9 [1, 2] : vector<1x2x256xf32> to vector<1xf32>
    %16 = vector.shape_cast %15 : vector<1xf32> to vector<1x1x1xf32>
    %17 = vector.extract %16[0, 0, 0] : f32 from vector<1x1x1xf32>
    %18 = vector.broadcast %17 : f32 to vector<1x1xf32>
    %cst_10 = arith.constant 0.001953125 : f32
    %19 = vector.broadcast %cst_10 : f32 to vector<1x1xf32>
    %20 = arith.mulf %18, %19 : vector<1x1xf32>
    %21 = arith.mulf %12, %12 : vector<1x1xf32>
    %22 = arith.subf %20, %21 : vector<1x1xf32>
    %23 = vector.broadcast %12 : vector<1x1xf32> to vector<2x256xf32>
    %24 = arith.subf %5, %23 : vector<2x256xf32>
    %cst_11 = arith.constant 9.99999974E-6 : f32
    %25 = vector.broadcast %cst_11 : f32 to vector<1x1xf32>
    %26 = arith.addf %22, %25 : vector<1x1xf32>
    %27 = math.rsqrt %26 : vector<1x1xf32>
    %28 = vector.broadcast %27 : vector<1x1xf32> to vector<2x256xf32>
    %29 = arith.mulf %24, %28 : vector<2x256xf32>
    %30 = vector.extract_strided_slice %1 {offsets = [2, 0], sizes = [2, 256], strides = [1, 1]} : vector<4x256xf32> to vector<2x256xf32>
    %31 = vector.shape_cast %30 : vector<2x256xf32> to vector<1x2x256xf32>
    %cst_12 = arith.constant dense<0.000000e+00> : vector<1xf32>
    %32 = vector.multi_reduction <add>, %31, %cst_12 [1, 2] : vector<1x2x256xf32> to vector<1xf32>
    %33 = vector.shape_cast %32 : vector<1xf32> to vector<1x1x1xf32>
    %34 = vector.extract %33[0, 0, 0] : f32 from vector<1x1x1xf32>
    %35 = vector.broadcast %34 : f32 to vector<1x1xf32>
    %cst_13 = arith.constant 0.001953125 : f32
    %36 = vector.broadcast %cst_13 : f32 to vector<1x1xf32>
    %37 = arith.mulf %35, %36 : vector<1x1xf32>
    %38 = arith.mulf %30, %30 : vector<2x256xf32>
    %39 = vector.shape_cast %38 : vector<2x256xf32> to vector<1x2x256xf32>
    %cst_14 = arith.constant dense<0.000000e+00> : vector<1xf32>
    %40 = vector.multi_reduction <add>, %39, %cst_14 [1, 2] : vector<1x2x256xf32> to vector<1xf32>
    %41 = vector.shape_cast %40 : vector<1xf32> to vector<1x1x1xf32>
    %42 = vector.extract %41[0, 0, 0] : f32 from vector<1x1x1xf32>
    %43 = vector.broadcast %42 : f32 to vector<1x1xf32>
    %cst_15 = arith.constant 0.001953125 : f32
    %44 = vector.broadcast %cst_15 : f32 to vector<1x1xf32>
    %45 = arith.mulf %43, %44 : vector<1x1xf32>
    %46 = arith.mulf %37, %37 : vector<1x1xf32>
    %47 = arith.subf %45, %46 : vector<1x1xf32>
    %48 = vector.broadcast %37 : vector<1x1xf32> to vector<2x256xf32>
    %49 = arith.subf %30, %48 : vector<2x256xf32>
    %cst_16 = arith.constant 9.99999974E-6 : f32
    %50 = vector.broadcast %cst_16 : f32 to vector<1x1xf32>
    %51 = arith.addf %47, %50 : vector<1x1xf32>
    %52 = math.rsqrt %51 : vector<1x1xf32>
    %53 = vector.broadcast %52 : vector<1x1xf32> to vector<2x256xf32>
    %54 = arith.mulf %49, %53 : vector<2x256xf32>
    %55 = tpu.concatenate %29, %54 in 0 : vector<2x256xf32>, vector<2x256xf32> -> vector<4x256xf32>
    %56 = vector.broadcast %3 : vector<4x1xf32> to vector<4x256xf32>
    %57 = arith.mulf %55, %56 : vector<4x256xf32>
    %58 = vector.broadcast %4 : vector<4x1xf32> to vector<4x256xf32>
    %59 = arith.addf %57, %58 : vector<4x256xf32>
    %60 = arith.negf %59 : vector<4x256xf32>
    %61 = math.exp %60 : vector<4x256xf32>
    %cst_17 = arith.constant 1.000000e+00 : f32
    %62 = vector.broadcast %cst_17 : f32 to vector<4x256xf32>
    %63 = arith.addf %62, %61 : vector<4x256xf32>
    %64 = arith.divf %62, %63 : vector<4x256xf32>
    %65 = arith.mulf %59, %64 : vector<4x256xf32>
    %c0_18 = arith.constant 0 : index
    %c0_19 = arith.constant 0 : index
    %66 = vector.load %arg9[%c0_18, %c0_19] : memref<8x1xf32, #tpu.memory_space<vmem>>, vector<8x1xf32>
    %c17_i32 = arith.constant 17 : i32
    %67 = tpu.dynamic_rotate %65 by %c17_i32 dim 1 : vector<4x256xf32>, i32 -> vector<4x256xf32>
    %68 = vector.extract_strided_slice %2 {offsets = [0, 0], sizes = [1, 256], strides = [1, 1]} : vector<9x256xf32> to vector<1x256xf32>
    %69 = vector.broadcast %68 : vector<1x256xf32> to vector<4x256xf32>
    %70 = arith.mulf %67, %69 : vector<4x256xf32>
    %c0_20 = arith.constant 0 : index
    %c0_21 = arith.constant 0 : index
    %c0_22 = arith.constant 0 : index
    %71 = vector.load %arg8[%c0_20, %c0_21, %c0_22] : memref<9x8x4xbf16, #tpu.memory_space<vmem>>, vector<1x8x4xbf16>
    %72 = vector.shape_cast %71 : vector<1x8x4xbf16> to vector<8x4xbf16>
    %73 = arith.truncf %70 : vector<4x256xf32> to vector<4x256xbf16>
    %cst_23 = arith.constant dense<0.000000e+00> : vector<8x256xf32>
    %74 = tpu.matmul %72, %73, %cst_23 {dimension_numbers = #tpu.dot_dimension_numbers<[1], [0], [0], [1], [0, 0, 1, 1], [], []>} : vector<8x4xbf16>, vector<4x256xbf16>, vector<8x256xf32> -> vector<8x256xf32>
    %c16_i32 = arith.constant 16 : i32
    %75 = tpu.dynamic_rotate %65 by %c16_i32 dim 1 : vector<4x256xf32>, i32 -> vector<4x256xf32>
    %76 = vector.extract_strided_slice %2 {offsets = [1, 0], sizes = [1, 256], strides = [1, 1]} : vector<9x256xf32> to vector<1x256xf32>
    %77 = vector.broadcast %76 : vector<1x256xf32> to vector<4x256xf32>
    %78 = arith.mulf %75, %77 : vector<4x256xf32>
    %c1 = arith.constant 1 : index
    %c0_24 = arith.constant 0 : index
    %c0_25 = arith.constant 0 : index
    %79 = vector.load %arg8[%c1, %c0_24, %c0_25] : memref<9x8x4xbf16, #tpu.memory_space<vmem>>, vector<1x8x4xbf16>
    %80 = vector.shape_cast %79 : vector<1x8x4xbf16> to vector<8x4xbf16>
    %81 = arith.truncf %78 : vector<4x256xf32> to vector<4x256xbf16>
    %cst_26 = arith.constant dense<0.000000e+00> : vector<8x256xf32>
    %82 = tpu.matmul %80, %81, %cst_26 {dimension_numbers = #tpu.dot_dimension_numbers<[1], [0], [0], [1], [0, 0, 1, 1], [], []>} : vector<8x4xbf16>, vector<4x256xbf16>, vector<8x256xf32> -> vector<8x256xf32>
    %83 = arith.addf %74, %82 : vector<8x256xf32>
    %c15_i32 = arith.constant 15 : i32
    %84 = tpu.dynamic_rotate %65 by %c15_i32 dim 1 : vector<4x256xf32>, i32 -> vector<4x256xf32>
    %85 = vector.extract_strided_slice %2 {offsets = [2, 0], sizes = [1, 256], strides = [1, 1]} : vector<9x256xf32> to vector<1x256xf32>
    %86 = vector.broadcast %85 : vector<1x256xf32> to vector<4x256xf32>
    %87 = arith.mulf %84, %86 : vector<4x256xf32>
    %c2 = arith.constant 2 : index
    %c0_27 = arith.constant 0 : index
    %c0_28 = arith.constant 0 : index
    %88 = vector.load %arg8[%c2, %c0_27, %c0_28] : memref<9x8x4xbf16, #tpu.memory_space<vmem>>, vector<1x8x4xbf16>
    %89 = vector.shape_cast %88 : vector<1x8x4xbf16> to vector<8x4xbf16>
    %90 = arith.truncf %87 : vector<4x256xf32> to vector<4x256xbf16>
    %cst_29 = arith.constant dense<0.000000e+00> : vector<8x256xf32>
    %91 = tpu.matmul %89, %90, %cst_29 {dimension_numbers = #tpu.dot_dimension_numbers<[1], [0], [0], [1], [0, 0, 1, 1], [], []>} : vector<8x4xbf16>, vector<4x256xbf16>, vector<8x256xf32> -> vector<8x256xf32>
    %92 = arith.addf %83, %91 : vector<8x256xf32>
    %c1_i32 = arith.constant 1 : i32
    %93 = tpu.dynamic_rotate %65 by %c1_i32 dim 1 : vector<4x256xf32>, i32 -> vector<4x256xf32>
    %94 = vector.extract_strided_slice %2 {offsets = [3, 0], sizes = [1, 256], strides = [1, 1]} : vector<9x256xf32> to vector<1x256xf32>
    %95 = vector.broadcast %94 : vector<1x256xf32> to vector<4x256xf32>
    %96 = arith.mulf %93, %95 : vector<4x256xf32>
    %c3 = arith.constant 3 : index
    %c0_30 = arith.constant 0 : index
    %c0_31 = arith.constant 0 : index
    %97 = vector.load %arg8[%c3, %c0_30, %c0_31] : memref<9x8x4xbf16, #tpu.memory_space<vmem>>, vector<1x8x4xbf16>
    %98 = vector.shape_cast %97 : vector<1x8x4xbf16> to vector<8x4xbf16>
    %99 = arith.truncf %96 : vector<4x256xf32> to vector<4x256xbf16>
    %cst_32 = arith.constant dense<0.000000e+00> : vector<8x256xf32>
    %100 = tpu.matmul %98, %99, %cst_32 {dimension_numbers = #tpu.dot_dimension_numbers<[1], [0], [0], [1], [0, 0, 1, 1], [], []>} : vector<8x4xbf16>, vector<4x256xbf16>, vector<8x256xf32> -> vector<8x256xf32>
    %101 = arith.addf %92, %100 : vector<8x256xf32>
    %c4 = arith.constant 4 : index
    %c0_33 = arith.constant 0 : index
    %c0_34 = arith.constant 0 : index
    %102 = vector.load %arg8[%c4, %c0_33, %c0_34] : memref<9x8x4xbf16, #tpu.memory_space<vmem>>, vector<1x8x4xbf16>
    %103 = vector.shape_cast %102 : vector<1x8x4xbf16> to vector<8x4xbf16>
    %104 = arith.truncf %65 : vector<4x256xf32> to vector<4x256xbf16>
    %cst_35 = arith.constant dense<0.000000e+00> : vector<8x256xf32>
    %105 = tpu.matmul %103, %104, %cst_35 {dimension_numbers = #tpu.dot_dimension_numbers<[1], [0], [0], [1], [0, 0, 1, 1], [], []>} : vector<8x4xbf16>, vector<4x256xbf16>, vector<8x256xf32> -> vector<8x256xf32>
    %106 = arith.addf %101, %105 : vector<8x256xf32>
    %c255_i32 = arith.constant 255 : i32
    %107 = tpu.dynamic_rotate %65 by %c255_i32 dim 1 : vector<4x256xf32>, i32 -> vector<4x256xf32>
    %108 = vector.extract_strided_slice %2 {offsets = [5, 0], sizes = [1, 256], strides = [1, 1]} : vector<9x256xf32> to vector<1x256xf32>
    %109 = vector.broadcast %108 : vector<1x256xf32> to vector<4x256xf32>
    %110 = arith.mulf %107, %109 : vector<4x256xf32>
    %c5 = arith.constant 5 : index
    %c0_36 = arith.constant 0 : index
    %c0_37 = arith.constant 0 : index
    %111 = vector.load %arg8[%c5, %c0_36, %c0_37] : memref<9x8x4xbf16, #tpu.memory_space<vmem>>, vector<1x8x4xbf16>
    %112 = vector.shape_cast %111 : vector<1x8x4xbf16> to vector<8x4xbf16>
    %113 = arith.truncf %110 : vector<4x256xf32> to vector<4x256xbf16>
    %cst_38 = arith.constant dense<0.000000e+00> : vector<8x256xf32>
    %114 = tpu.matmul %112, %113, %cst_38 {dimension_numbers = #tpu.dot_dimension_numbers<[1], [0], [0], [1], [0, 0, 1, 1], [], []>} : vector<8x4xbf16>, vector<4x256xbf16>, vector<8x256xf32> -> vector<8x256xf32>
    %115 = arith.addf %106, %114 : vector<8x256xf32>
    %c241_i32 = arith.constant 241 : i32
    %116 = tpu.dynamic_rotate %65 by %c241_i32 dim 1 : vector<4x256xf32>, i32 -> vector<4x256xf32>
    %117 = vector.extract_strided_slice %2 {offsets = [6, 0], sizes = [1, 256], strides = [1, 1]} : vector<9x256xf32> to vector<1x256xf32>
    %118 = vector.broadcast %117 : vector<1x256xf32> to vector<4x256xf32>
    %119 = arith.mulf %116, %118 : vector<4x256xf32>
    %c6 = arith.constant 6 : index
    %c0_39 = arith.constant 0 : index
    %c0_40 = arith.constant 0 : index
    %120 = vector.load %arg8[%c6, %c0_39, %c0_40] : memref<9x8x4xbf16, #tpu.memory_space<vmem>>, vector<1x8x4xbf16>
    %121 = vector.shape_cast %120 : vector<1x8x4xbf16> to vector<8x4xbf16>
    %122 = arith.truncf %119 : vector<4x256xf32> to vector<4x256xbf16>
    %cst_41 = arith.constant dense<0.000000e+00> : vector<8x256xf32>
    %123 = tpu.matmul %121, %122, %cst_41 {dimension_numbers = #tpu.dot_dimension_numbers<[1], [0], [0], [1], [0, 0, 1, 1], [], []>} : vector<8x4xbf16>, vector<4x256xbf16>, vector<8x256xf32> -> vector<8x256xf32>
    %124 = arith.addf %115, %123 : vector<8x256xf32>
    %c240_i32 = arith.constant 240 : i32
    %125 = tpu.dynamic_rotate %65 by %c240_i32 dim 1 : vector<4x256xf32>, i32 -> vector<4x256xf32>
    %126 = vector.extract_strided_slice %2 {offsets = [7, 0], sizes = [1, 256], strides = [1, 1]} : vector<9x256xf32> to vector<1x256xf32>
    %127 = vector.broadcast %126 : vector<1x256xf32> to vector<4x256xf32>
    %128 = arith.mulf %125, %127 : vector<4x256xf32>
    %c7 = arith.constant 7 : index
    %c0_42 = arith.constant 0 : index
    %c0_43 = arith.constant 0 : index
    %129 = vector.load %arg8[%c7, %c0_42, %c0_43] : memref<9x8x4xbf16, #tpu.memory_space<vmem>>, vector<1x8x4xbf16>
    %130 = vector.shape_cast %129 : vector<1x8x4xbf16> to vector<8x4xbf16>
    %131 = arith.truncf %128 : vector<4x256xf32> to vector<4x256xbf16>
    %cst_44 = arith.constant dense<0.000000e+00> : vector<8x256xf32>
    %132 = tpu.matmul %130, %131, %cst_44 {dimension_numbers = #tpu.dot_dimension_numbers<[1], [0], [0], [1], [0, 0, 1, 1], [], []>} : vector<8x4xbf16>, vector<4x256xbf16>, vector<8x256xf32> -> vector<8x256xf32>
    %133 = arith.addf %124, %132 : vector<8x256xf32>
    %c239_i32 = arith.constant 239 : i32
    %134 = tpu.dynamic_rotate %65 by %c239_i32 dim 1 : vector<4x256xf32>, i32 -> vector<4x256xf32>
    %135 = vector.extract_strided_slice %2 {offsets = [8, 0], sizes = [1, 256], strides = [1, 1]} : vector<9x256xf32> to vector<1x256xf32>
    %136 = vector.broadcast %135 : vector<1x256xf32> to vector<4x256xf32>
    %137 = arith.mulf %134, %136 : vector<4x256xf32>
    %c8 = arith.constant 8 : index
    %c0_45 = arith.constant 0 : index
    %c0_46 = arith.constant 0 : index
    %138 = vector.load %arg8[%c8, %c0_45, %c0_46] : memref<9x8x4xbf16, #tpu.memory_space<vmem>>, vector<1x8x4xbf16>
    %139 = vector.shape_cast %138 : vector<1x8x4xbf16> to vector<8x4xbf16>
    %140 = arith.truncf %137 : vector<4x256xf32> to vector<4x256xbf16>
    %cst_47 = arith.constant dense<0.000000e+00> : vector<8x256xf32>
    %141 = tpu.matmul %139, %140, %cst_47 {dimension_numbers = #tpu.dot_dimension_numbers<[1], [0], [0], [1], [0, 0, 1, 1], [], []>} : vector<8x4xbf16>, vector<4x256xbf16>, vector<8x256xf32> -> vector<8x256xf32>
    %142 = arith.addf %133, %141 : vector<8x256xf32>
    %143 = vector.broadcast %66 : vector<8x1xf32> to vector<8x256xf32>
    %144 = arith.addf %142, %143 : vector<8x256xf32>
    %c0_48 = arith.constant 0 : index
    %c0_49 = arith.constant 0 : index
    %145 = vector.load %arg4[%c0_48, %c0_49] : memref<8x32xf32, #tpu.memory_space<vmem>>, vector<8x32xf32>
    %c0_50 = arith.constant 0 : index
    %c0_51 = arith.constant 0 : index
    %c0_52 = arith.constant 0 : index
    %146 = vector.load %arg2[%c0_50, %c0_51, %c0_52] : memref<1x1x32xf32, #tpu.memory_space<vmem>>, vector<1x1x32xf32>
    %147 = vector.shape_cast %146 : vector<1x1x32xf32> to vector<1x32xf32>
    %148 = vector.broadcast %147 : vector<1x32xf32> to vector<8x32xf32>
    %149 = arith.mulf %145, %148 : vector<8x32xf32>
    %cst_53 = arith.constant dense<0.000000e+00> : vector<8xf32>
    %150 = vector.multi_reduction <add>, %149, %cst_53 [1] : vector<8x32xf32> to vector<8xf32>
    %151 = vector.shape_cast %150 : vector<8xf32> to vector<8x1xf32>
    %c0_54 = arith.constant 0 : index
    %c0_55 = arith.constant 0 : index
    %152 = vector.load %arg5[%c0_54, %c0_55] : memref<8x1xf32, #tpu.memory_space<vmem>>, vector<8x1xf32>
    %153 = arith.addf %151, %152 : vector<8x1xf32>
    %154 = vector.broadcast %153 : vector<8x1xf32> to vector<8x256xf32>
    %155 = arith.addf %144, %154 : vector<8x256xf32>
    %c0_56 = arith.constant 0 : index
    %c0_57 = arith.constant 0 : index
    %156 = vector.load %arg10[%c0_56, %c0_57] : memref<8x1xf32, #tpu.memory_space<vmem>>, vector<8x1xf32>
    %c0_58 = arith.constant 0 : index
    %c0_59 = arith.constant 0 : index
    %157 = vector.load %arg11[%c0_58, %c0_59] : memref<8x1xf32, #tpu.memory_space<vmem>>, vector<8x1xf32>
    %158 = vector.extract_strided_slice %155 {offsets = [0, 0], sizes = [4, 256], strides = [1, 1]} : vector<8x256xf32> to vector<4x256xf32>
    %159 = vector.shape_cast %158 : vector<4x256xf32> to vector<1x4x256xf32>
    %cst_60 = arith.constant dense<0.000000e+00> : vector<1xf32>
    %160 = vector.multi_reduction <add>, %159, %cst_60 [1, 2] : vector<1x4x256xf32> to vector<1xf32>
    %161 = vector.shape_cast %160 : vector<1xf32> to vector<1x1x1xf32>
    %162 = vector.extract %161[0, 0, 0] : f32 from vector<1x1x1xf32>
    %163 = vector.broadcast %162 : f32 to vector<1x1xf32>
    %cst_61 = arith.constant 9.765625E-4 : f32
    %164 = vector.broadcast %cst_61 : f32 to vector<1x1xf32>
    %165 = arith.mulf %163, %164 : vector<1x1xf32>
    %166 = arith.mulf %158, %158 : vector<4x256xf32>
    %167 = vector.shape_cast %166 : vector<4x256xf32> to vector<1x4x256xf32>
    %cst_62 = arith.constant dense<0.000000e+00> : vector<1xf32>
    %168 = vector.multi_reduction <add>, %167, %cst_62 [1, 2] : vector<1x4x256xf32> to vector<1xf32>
    %169 = vector.shape_cast %168 : vector<1xf32> to vector<1x1x1xf32>
    %170 = vector.extract %169[0, 0, 0] : f32 from vector<1x1x1xf32>
    %171 = vector.broadcast %170 : f32 to vector<1x1xf32>
    %cst_63 = arith.constant 9.765625E-4 : f32
    %172 = vector.broadcast %cst_63 : f32 to vector<1x1xf32>
    %173 = arith.mulf %171, %172 : vector<1x1xf32>
    %174 = arith.mulf %165, %165 : vector<1x1xf32>
    %175 = arith.subf %173, %174 : vector<1x1xf32>
    %176 = vector.broadcast %165 : vector<1x1xf32> to vector<4x256xf32>
    %177 = arith.subf %158, %176 : vector<4x256xf32>
    %cst_64 = arith.constant 9.99999974E-6 : f32
    %178 = vector.broadcast %cst_64 : f32 to vector<1x1xf32>
    %179 = arith.addf %175, %178 : vector<1x1xf32>
    %180 = math.rsqrt %179 : vector<1x1xf32>
    %181 = vector.broadcast %180 : vector<1x1xf32> to vector<4x256xf32>
    %182 = arith.mulf %177, %181 : vector<4x256xf32>
    %183 = vector.extract_strided_slice %155 {offsets = [4, 0], sizes = [4, 256], strides = [1, 1]} : vector<8x256xf32> to vector<4x256xf32>
    %184 = vector.shape_cast %183 : vector<4x256xf32> to vector<1x4x256xf32>
    %cst_65 = arith.constant dense<0.000000e+00> : vector<1xf32>
    %185 = vector.multi_reduction <add>, %184, %cst_65 [1, 2] : vector<1x4x256xf32> to vector<1xf32>
    %186 = vector.shape_cast %185 : vector<1xf32> to vector<1x1x1xf32>
    %187 = vector.extract %186[0, 0, 0] : f32 from vector<1x1x1xf32>
    %188 = vector.broadcast %187 : f32 to vector<1x1xf32>
    %cst_66 = arith.constant 9.765625E-4 : f32
    %189 = vector.broadcast %cst_66 : f32 to vector<1x1xf32>
    %190 = arith.mulf %188, %189 : vector<1x1xf32>
    %191 = arith.mulf %183, %183 : vector<4x256xf32>
    %192 = vector.shape_cast %191 : vector<4x256xf32> to vector<1x4x256xf32>
    %cst_67 = arith.constant dense<0.000000e+00> : vector<1xf32>
    %193 = vector.multi_reduction <add>, %192, %cst_67 [1, 2] : vector<1x4x256xf32> to vector<1xf32>
    %194 = vector.shape_cast %193 : vector<1xf32> to vector<1x1x1xf32>
    %195 = vector.extract %194[0, 0, 0] : f32 from vector<1x1x1xf32>
    %196 = vector.broadcast %195 : f32 to vector<1x1xf32>
    %cst_68 = arith.constant 9.765625E-4 : f32
    %197 = vector.broadcast %cst_68 : f32 to vector<1x1xf32>
    %198 = arith.mulf %196, %197 : vector<1x1xf32>
    %199 = arith.mulf %190, %190 : vector<1x1xf32>
    %200 = arith.subf %198, %199 : vector<1x1xf32>
    %201 = vector.broadcast %190 : vector<1x1xf32> to vector<4x256xf32>
    %202 = arith.subf %183, %201 : vector<4x256xf32>
    %cst_69 = arith.constant 9.99999974E-6 : f32
    %203 = vector.broadcast %cst_69 : f32 to vector<1x1xf32>
    %204 = arith.addf %200, %203 : vector<1x1xf32>
    %205 = math.rsqrt %204 : vector<1x1xf32>
    %206 = vector.broadcast %205 : vector<1x1xf32> to vector<4x256xf32>
    %207 = arith.mulf %202, %206 : vector<4x256xf32>
    %208 = tpu.concatenate %182, %207 in 0 : vector<4x256xf32>, vector<4x256xf32> -> vector<8x256xf32>
    %209 = vector.broadcast %156 : vector<8x1xf32> to vector<8x256xf32>
    %210 = arith.mulf %208, %209 : vector<8x256xf32>
    %211 = vector.broadcast %157 : vector<8x1xf32> to vector<8x256xf32>
    %212 = arith.addf %210, %211 : vector<8x256xf32>
    %213 = arith.negf %212 : vector<8x256xf32>
    %214 = math.exp %213 : vector<8x256xf32>
    %cst_70 = arith.constant 1.000000e+00 : f32
    %215 = vector.broadcast %cst_70 : f32 to vector<8x256xf32>
    %216 = arith.addf %215, %214 : vector<8x256xf32>
    %217 = arith.divf %215, %216 : vector<8x256xf32>
    %218 = arith.mulf %212, %217 : vector<8x256xf32>
    %c0_71 = arith.constant 0 : index
    %c0_72 = arith.constant 0 : index
    %219 = vector.load %arg13[%c0_71, %c0_72] : memref<8x1xf32, #tpu.memory_space<vmem>>, vector<8x1xf32>
    %c17_i32_73 = arith.constant 17 : i32
    %220 = tpu.dynamic_rotate %218 by %c17_i32_73 dim 1 : vector<8x256xf32>, i32 -> vector<8x256xf32>
    %221 = vector.extract_strided_slice %2 {offsets = [0, 0], sizes = [1, 256], strides = [1, 1]} : vector<9x256xf32> to vector<1x256xf32>
    %222 = vector.broadcast %221 : vector<1x256xf32> to vector<8x256xf32>
    %223 = arith.mulf %220, %222 : vector<8x256xf32>
    %c0_74 = arith.constant 0 : index
    %c0_75 = arith.constant 0 : index
    %c0_76 = arith.constant 0 : index
    %224 = vector.load %arg12[%c0_74, %c0_75, %c0_76] : memref<9x8x8xbf16, #tpu.memory_space<vmem>>, vector<1x8x8xbf16>
    %225 = vector.shape_cast %224 : vector<1x8x8xbf16> to vector<8x8xbf16>
    %226 = arith.truncf %223 : vector<8x256xf32> to vector<8x256xbf16>
    %cst_77 = arith.constant dense<0.000000e+00> : vector<8x256xf32>
    %227 = tpu.matmul %225, %226, %cst_77 {dimension_numbers = #tpu.dot_dimension_numbers<[1], [0], [0], [1], [0, 0, 1, 1], [], []>} : vector<8x8xbf16>, vector<8x256xbf16>, vector<8x256xf32> -> vector<8x256xf32>
    %c16_i32_78 = arith.constant 16 : i32
    %228 = tpu.dynamic_rotate %218 by %c16_i32_78 dim 1 : vector<8x256xf32>, i32 -> vector<8x256xf32>
    %229 = vector.extract_strided_slice %2 {offsets = [1, 0], sizes = [1, 256], strides = [1, 1]} : vector<9x256xf32> to vector<1x256xf32>
    %230 = vector.broadcast %229 : vector<1x256xf32> to vector<8x256xf32>
    %231 = arith.mulf %228, %230 : vector<8x256xf32>
    %c1_79 = arith.constant 1 : index
    %c0_80 = arith.constant 0 : index
    %c0_81 = arith.constant 0 : index
    %232 = vector.load %arg12[%c1_79, %c0_80, %c0_81] : memref<9x8x8xbf16, #tpu.memory_space<vmem>>, vector<1x8x8xbf16>
    %233 = vector.shape_cast %232 : vector<1x8x8xbf16> to vector<8x8xbf16>
    %234 = arith.truncf %231 : vector<8x256xf32> to vector<8x256xbf16>
    %cst_82 = arith.constant dense<0.000000e+00> : vector<8x256xf32>
    %235 = tpu.matmul %233, %234, %cst_82 {dimension_numbers = #tpu.dot_dimension_numbers<[1], [0], [0], [1], [0, 0, 1, 1], [], []>} : vector<8x8xbf16>, vector<8x256xbf16>, vector<8x256xf32> -> vector<8x256xf32>
    %236 = arith.addf %227, %235 : vector<8x256xf32>
    %c15_i32_83 = arith.constant 15 : i32
    %237 = tpu.dynamic_rotate %218 by %c15_i32_83 dim 1 : vector<8x256xf32>, i32 -> vector<8x256xf32>
    %238 = vector.extract_strided_slice %2 {offsets = [2, 0], sizes = [1, 256], strides = [1, 1]} : vector<9x256xf32> to vector<1x256xf32>
    %239 = vector.broadcast %238 : vector<1x256xf32> to vector<8x256xf32>
    %240 = arith.mulf %237, %239 : vector<8x256xf32>
    %c2_84 = arith.constant 2 : index
    %c0_85 = arith.constant 0 : index
    %c0_86 = arith.constant 0 : index
    %241 = vector.load %arg12[%c2_84, %c0_85, %c0_86] : memref<9x8x8xbf16, #tpu.memory_space<vmem>>, vector<1x8x8xbf16>
    %242 = vector.shape_cast %241 : vector<1x8x8xbf16> to vector<8x8xbf16>
    %243 = arith.truncf %240 : vector<8x256xf32> to vector<8x256xbf16>
    %cst_87 = arith.constant dense<0.000000e+00> : vector<8x256xf32>
    %244 = tpu.matmul %242, %243, %cst_87 {dimension_numbers = #tpu.dot_dimension_numbers<[1], [0], [0], [1], [0, 0, 1, 1], [], []>} : vector<8x8xbf16>, vector<8x256xbf16>, vector<8x256xf32> -> vector<8x256xf32>
    %245 = arith.addf %236, %244 : vector<8x256xf32>
    %c1_i32_88 = arith.constant 1 : i32
    %246 = tpu.dynamic_rotate %218 by %c1_i32_88 dim 1 : vector<8x256xf32>, i32 -> vector<8x256xf32>
    %247 = vector.extract_strided_slice %2 {offsets = [3, 0], sizes = [1, 256], strides = [1, 1]} : vector<9x256xf32> to vector<1x256xf32>
    %248 = vector.broadcast %247 : vector<1x256xf32> to vector<8x256xf32>
    %249 = arith.mulf %246, %248 : vector<8x256xf32>
    %c3_89 = arith.constant 3 : index
    %c0_90 = arith.constant 0 : index
    %c0_91 = arith.constant 0 : index
    %250 = vector.load %arg12[%c3_89, %c0_90, %c0_91] : memref<9x8x8xbf16, #tpu.memory_space<vmem>>, vector<1x8x8xbf16>
    %251 = vector.shape_cast %250 : vector<1x8x8xbf16> to vector<8x8xbf16>
    %252 = arith.truncf %249 : vector<8x256xf32> to vector<8x256xbf16>
    %cst_92 = arith.constant dense<0.000000e+00> : vector<8x256xf32>
    %253 = tpu.matmul %251, %252, %cst_92 {dimension_numbers = #tpu.dot_dimension_numbers<[1], [0], [0], [1], [0, 0, 1, 1], [], []>} : vector<8x8xbf16>, vector<8x256xbf16>, vector<8x256xf32> -> vector<8x256xf32>
    %254 = arith.addf %245, %253 : vector<8x256xf32>
    %c4_93 = arith.constant 4 : index
    %c0_94 = arith.constant 0 : index
    %c0_95 = arith.constant 0 : index
    %255 = vector.load %arg12[%c4_93, %c0_94, %c0_95] : memref<9x8x8xbf16, #tpu.memory_space<vmem>>, vector<1x8x8xbf16>
    %256 = vector.shape_cast %255 : vector<1x8x8xbf16> to vector<8x8xbf16>
    %257 = arith.truncf %218 : vector<8x256xf32> to vector<8x256xbf16>
    %cst_96 = arith.constant dense<0.000000e+00> : vector<8x256xf32>
    %258 = tpu.matmul %256, %257, %cst_96 {dimension_numbers = #tpu.dot_dimension_numbers<[1], [0], [0], [1], [0, 0, 1, 1], [], []>} : vector<8x8xbf16>, vector<8x256xbf16>, vector<8x256xf32> -> vector<8x256xf32>
    %259 = arith.addf %254, %258 : vector<8x256xf32>
    %c255_i32_97 = arith.constant 255 : i32
    %260 = tpu.dynamic_rotate %218 by %c255_i32_97 dim 1 : vector<8x256xf32>, i32 -> vector<8x256xf32>
    %261 = vector.extract_strided_slice %2 {offsets = [5, 0], sizes = [1, 256], strides = [1, 1]} : vector<9x256xf32> to vector<1x256xf32>
    %262 = vector.broadcast %261 : vector<1x256xf32> to vector<8x256xf32>
    %263 = arith.mulf %260, %262 : vector<8x256xf32>
    %c5_98 = arith.constant 5 : index
    %c0_99 = arith.constant 0 : index
    %c0_100 = arith.constant 0 : index
    %264 = vector.load %arg12[%c5_98, %c0_99, %c0_100] : memref<9x8x8xbf16, #tpu.memory_space<vmem>>, vector<1x8x8xbf16>
    %265 = vector.shape_cast %264 : vector<1x8x8xbf16> to vector<8x8xbf16>
    %266 = arith.truncf %263 : vector<8x256xf32> to vector<8x256xbf16>
    %cst_101 = arith.constant dense<0.000000e+00> : vector<8x256xf32>
    %267 = tpu.matmul %265, %266, %cst_101 {dimension_numbers = #tpu.dot_dimension_numbers<[1], [0], [0], [1], [0, 0, 1, 1], [], []>} : vector<8x8xbf16>, vector<8x256xbf16>, vector<8x256xf32> -> vector<8x256xf32>
    %268 = arith.addf %259, %267 : vector<8x256xf32>
    %c241_i32_102 = arith.constant 241 : i32
    %269 = tpu.dynamic_rotate %218 by %c241_i32_102 dim 1 : vector<8x256xf32>, i32 -> vector<8x256xf32>
    %270 = vector.extract_strided_slice %2 {offsets = [6, 0], sizes = [1, 256], strides = [1, 1]} : vector<9x256xf32> to vector<1x256xf32>
    %271 = vector.broadcast %270 : vector<1x256xf32> to vector<8x256xf32>
    %272 = arith.mulf %269, %271 : vector<8x256xf32>
    %c6_103 = arith.constant 6 : index
    %c0_104 = arith.constant 0 : index
    %c0_105 = arith.constant 0 : index
    %273 = vector.load %arg12[%c6_103, %c0_104, %c0_105] : memref<9x8x8xbf16, #tpu.memory_space<vmem>>, vector<1x8x8xbf16>
    %274 = vector.shape_cast %273 : vector<1x8x8xbf16> to vector<8x8xbf16>
    %275 = arith.truncf %272 : vector<8x256xf32> to vector<8x256xbf16>
    %cst_106 = arith.constant dense<0.000000e+00> : vector<8x256xf32>
    %276 = tpu.matmul %274, %275, %cst_106 {dimension_numbers = #tpu.dot_dimension_numbers<[1], [0], [0], [1], [0, 0, 1, 1], [], []>} : vector<8x8xbf16>, vector<8x256xbf16>, vector<8x256xf32> -> vector<8x256xf32>
    %277 = arith.addf %268, %276 : vector<8x256xf32>
    %c240_i32_107 = arith.constant 240 : i32
    %278 = tpu.dynamic_rotate %218 by %c240_i32_107 dim 1 : vector<8x256xf32>, i32 -> vector<8x256xf32>
    %279 = vector.extract_strided_slice %2 {offsets = [7, 0], sizes = [1, 256], strides = [1, 1]} : vector<9x256xf32> to vector<1x256xf32>
    %280 = vector.broadcast %279 : vector<1x256xf32> to vector<8x256xf32>
    %281 = arith.mulf %278, %280 : vector<8x256xf32>
    %c7_108 = arith.constant 7 : index
    %c0_109 = arith.constant 0 : index
    %c0_110 = arith.constant 0 : index
    %282 = vector.load %arg12[%c7_108, %c0_109, %c0_110] : memref<9x8x8xbf16, #tpu.memory_space<vmem>>, vector<1x8x8xbf16>
    %283 = vector.shape_cast %282 : vector<1x8x8xbf16> to vector<8x8xbf16>
    %284 = arith.truncf %281 : vector<8x256xf32> to vector<8x256xbf16>
    %cst_111 = arith.constant dense<0.000000e+00> : vector<8x256xf32>
    %285 = tpu.matmul %283, %284, %cst_111 {dimension_numbers = #tpu.dot_dimension_numbers<[1], [0], [0], [1], [0, 0, 1, 1], [], []>} : vector<8x8xbf16>, vector<8x256xbf16>, vector<8x256xf32> -> vector<8x256xf32>
    %286 = arith.addf %277, %285 : vector<8x256xf32>
    %c239_i32_112 = arith.constant 239 : i32
    %287 = tpu.dynamic_rotate %218 by %c239_i32_112 dim 1 : vector<8x256xf32>, i32 -> vector<8x256xf32>
    %288 = vector.extract_strided_slice %2 {offsets = [8, 0], sizes = [1, 256], strides = [1, 1]} : vector<9x256xf32> to vector<1x256xf32>
    %289 = vector.broadcast %288 : vector<1x256xf32> to vector<8x256xf32>
    %290 = arith.mulf %287, %289 : vector<8x256xf32>
    %c8_113 = arith.constant 8 : index
    %c0_114 = arith.constant 0 : index
    %c0_115 = arith.constant 0 : index
    %291 = vector.load %arg12[%c8_113, %c0_114, %c0_115] : memref<9x8x8xbf16, #tpu.memory_space<vmem>>, vector<1x8x8xbf16>
    %292 = vector.shape_cast %291 : vector<1x8x8xbf16> to vector<8x8xbf16>
    %293 = arith.truncf %290 : vector<8x256xf32> to vector<8x256xbf16>
    %cst_116 = arith.constant dense<0.000000e+00> : vector<8x256xf32>
    %294 = tpu.matmul %292, %293, %cst_116 {dimension_numbers = #tpu.dot_dimension_numbers<[1], [0], [0], [1], [0, 0, 1, 1], [], []>} : vector<8x8xbf16>, vector<8x256xbf16>, vector<8x256xf32> -> vector<8x256xf32>
    %295 = arith.addf %286, %294 : vector<8x256xf32>
    %296 = vector.broadcast %219 : vector<8x1xf32> to vector<8x256xf32>
    %297 = arith.addf %295, %296 : vector<8x256xf32>
    %c0_117 = arith.constant 0 : index
    %c0_118 = arith.constant 0 : index
    %298 = vector.load %arg14[%c0_117, %c0_118] : memref<8x4xbf16, #tpu.memory_space<vmem>>, vector<8x4xbf16>
    %299 = arith.truncf %1 : vector<4x256xf32> to vector<4x256xbf16>
    %cst_119 = arith.constant dense<0.000000e+00> : vector<8x256xf32>
    %300 = tpu.matmul %298, %299, %cst_119 {dimension_numbers = #tpu.dot_dimension_numbers<[1], [0], [0], [1], [0, 0, 1, 1], [], []>} : vector<8x4xbf16>, vector<4x256xbf16>, vector<8x256xf32> -> vector<8x256xf32>
    %301 = arith.addf %297, %300 : vector<8x256xf32>
    %c0_120 = arith.constant 0 : index
    %c0_121 = arith.constant 0 : index
    %302 = vector.load %arg15[%c0_120, %c0_121] : memref<8x1xf32, #tpu.memory_space<vmem>>, vector<8x1xf32>
    %303 = vector.broadcast %302 : vector<8x1xf32> to vector<8x256xf32>
    %304 = arith.addf %301, %303 : vector<8x256xf32>
    %c0_122 = arith.constant 0 : index
    %c0_123 = arith.constant 0 : index
    %c0_124 = arith.constant 0 : index
    %305 = vector.load %arg16[%c0_122, %c0_123, %c0_124] : memref<1x8x256xf32, #tpu.memory_space<vmem>>, vector<1x8x256xf32>
    %306 = vector.shape_cast %305 : vector<1x8x256xf32> to vector<8x256xf32>
    %307 = vector.shape_cast %304 : vector<8x256xf32> to vector<1x8x256xf32>
    tpu.vector_store %arg16[%c0_122, %c0_123, %c0_124], %307 {strides = array<i32>} : memref<1x8x256xf32, #tpu.memory_space<vmem>>, vector<1x8x256xf32>,
    return
  }
  func.func @transform_0(%arg0: i32) -> (i32, i32, i32) {
    %c0_i32 = arith.constant 0 : i32
    %c0_i32_0 = arith.constant 0 : i32
    %c0_i32_1 = arith.constant 0 : i32
    return %arg0, %c0_i32, %c0_i32_0 : i32, i32, i32
  }
  func.func @transform_1(%arg0: i32) -> (i32, i32, i32) {
    %c0_i32 = arith.constant 0 : i32
    %c0_i32_0 = arith.constant 0 : i32
    %c0_i32_1 = arith.constant 0 : i32
    return %arg0, %c0_i32, %c0_i32_0 : i32, i32, i32
  }
  func.func @transform_2(%arg0: i32) -> (i32, i32) {
    %c0_i32 = arith.constant 0 : i32
    %c0_i32_0 = arith.constant 0 : i32
    %c0_i32_1 = arith.constant 0 : i32
    return %c0_i32, %c0_i32_0 : i32, i32
  }
  func.func @transform_3(%arg0: i32) -> (i32, i32) {
    %c0_i32 = arith.constant 0 : i32
    %c0_i32_0 = arith.constant 0 : i32
    %c0_i32_1 = arith.constant 0 : i32
    return %c0_i32, %c0_i32_0 : i32, i32
  }
  func.func @transform_4(%arg0: i32) -> (i32, i32) {
    %c0_i32 = arith.constant 0 : i32
    %c0_i32_0 = arith.constant 0 : i32
    %c0_i32_1 = arith.constant 0 : i32
    return %c0_i32, %c0_i32_0 : i32, i32
  }
  func.func @transform_5(%arg0: i32) -> (i32, i32) {
    %c0_i32 = arith.constant 0 : i32
    %c0_i32_0 = arith.constant 0 : i32
    %c0_i32_1 = arith.constant 0 : i32
    return %c0_i32, %c0_i32_0 : i32, i32
  }
  func.func @transform_6(%arg0: i32) -> (i32, i32) {
    %c0_i32 = arith.constant 0 : i32
    %c0_i32_0 = arith.constant 0 : i32
    %c0_i32_1 = arith.constant 0 : i32
    return %c0_i32, %c0_i32_0 : i32, i32
  }
  func.func @transform_7(%arg0: i32) -> (i32, i32, i32) {
    %c0_i32 = arith.constant 0 : i32
    %c0_i32_0 = arith.constant 0 : i32
    %c0_i32_1 = arith.constant 0 : i32
    %c0_i32_2 = arith.constant 0 : i32
    return %c0_i32, %c0_i32_0, %c0_i32_1 : i32, i32, i32
  }
  func.func @transform_8(%arg0: i32) -> (i32, i32) {
    %c0_i32 = arith.constant 0 : i32
    %c0_i32_0 = arith.constant 0 : i32
    %c0_i32_1 = arith.constant 0 : i32
    return %c0_i32, %c0_i32_0 : i32, i32
  }
  func.func @transform_9(%arg0: i32) -> (i32, i32) {
    %c0_i32 = arith.constant 0 : i32
    %c0_i32_0 = arith.constant 0 : i32
    %c0_i32_1 = arith.constant 0 : i32
    return %c0_i32, %c0_i32_0 : i32, i32
  }
  func.func @transform_10(%arg0: i32) -> (i32, i32) {
    %c0_i32 = arith.constant 0 : i32
    %c0_i32_0 = arith.constant 0 : i32
    %c0_i32_1 = arith.constant 0 : i32
    return %c0_i32, %c0_i32_0 : i32, i32
  }
  func.func @transform_11(%arg0: i32) -> (i32, i32, i32) {
    %c0_i32 = arith.constant 0 : i32
    %c0_i32_0 = arith.constant 0 : i32
    %c0_i32_1 = arith.constant 0 : i32
    %c0_i32_2 = arith.constant 0 : i32
    return %c0_i32, %c0_i32_0, %c0_i32_1 : i32, i32, i32
  }
  func.func @transform_12(%arg0: i32) -> (i32, i32) {
    %c0_i32 = arith.constant 0 : i32
    %c0_i32_0 = arith.constant 0 : i32
    %c0_i32_1 = arith.constant 0 : i32
    return %c0_i32, %c0_i32_0 : i32, i32
  }
  func.func @transform_13(%arg0: i32) -> (i32, i32) {
    %c0_i32 = arith.constant 0 : i32
    %c0_i32_0 = arith.constant 0 : i32
    %c0_i32_1 = arith.constant 0 : i32
    return %c0_i32, %c0_i32_0 : i32, i32
  }
  func.func @transform_14(%arg0: i32) -> (i32, i32) {
    %c0_i32 = arith.constant 0 : i32
    %c0_i32_0 = arith.constant 0 : i32
    %c0_i32_1 = arith.constant 0 : i32
    return %c0_i32, %c0_i32_0 : i32, i32
  }
  func.func @transform_15(%arg0: i32) -> (i32, i32, i32) {
    %c0_i32 = arith.constant 0 : i32
    %c0_i32_0 = arith.constant 0 : i32
    %c0_i32_1 = arith.constant 0 : i32
    return %arg0, %c0_i32, %c0_i32_0 : i32, i32, i32
  }
}

</mosaic_0001>

<llo_original>
// kernel: tpu_custom_call.1
$region0: #{tpu_custom_call.1}
  #allocation0 [shape = 'u32[]', space=smem, size = 0x4, offset = 0x4, fixed_abs, tag = 'smem constant byte address 0x4 - core index']
  #allocation1 [shape = 'u32[72,128]{1,0:T(1,128)}', space=vmem, size = 0x9000, scoped, tag = 'internal scratch']
  %s0 = inlined_call_operand.vmem [shape: f32[2,4,256], index: 0, kind: input, shape index: {}]
  %s1 = inlined_call_operand.vmem [shape: f32[2,1,32], index: 1, kind: input, shape index: {}]
  %s2 = inlined_call_operand.vmem [shape: f32[9,256], index: 2, kind: input, shape index: {}]
  %s3 = inlined_call_operand.vmem [shape: f32[8,32], index: 3, kind: input, shape index: {}]
  %s4 = inlined_call_operand.vmem [shape: f32[8,1], index: 4, kind: input, shape index: {}]
  %s5 = inlined_call_operand.vmem [shape: f32[4,1], index: 5, kind: input, shape index: {}]
  %s6 = inlined_call_operand.vmem [shape: f32[4,1], index: 6, kind: input, shape index: {}]
  %s7 = inlined_call_operand.vmem [shape: bf16[9,8,4], index: 7, kind: input, shape index: {}]
  %s8 = inlined_call_operand.vmem [shape: f32[8,1], index: 8, kind: input, shape index: {}]
  %s9 = inlined_call_operand.vmem [shape: f32[8,1], index: 9, kind: input, shape index: {}]
  %s10 = inlined_call_operand.vmem [shape: f32[8,1], index: 10, kind: input, shape index: {}]
  %s11 = inlined_call_operand.vmem [shape: bf16[9,8,8], index: 11, kind: input, shape index: {}]
  %s12 = inlined_call_operand.vmem [shape: f32[8,1], index: 12, kind: input, shape index: {}]
  %s13 = inlined_call_operand.vmem [shape: bf16[8,4], index: 13, kind: input, shape index: {}]
  %s14 = inlined_call_operand.vmem [shape: f32[8,1], index: 14, kind: input, shape index: {}]
  %s15 = inlined_call_operand.hbm [shape: f32[2,8,256], index: 15, kind: output, shape index: {}]
  %s16 = sld [smem:[#allocation0]]
  $region93: #{tpu_custom_call.1} parent=0
    _
  %s18 = ssub.s32 1, %s16
  %s19 = scalar_select 0, %s18, %s16
  $region1: #{tpu_custom_call.1} parent=0
    #allocation2 [shape = 'u8[16384]{0}', space=vmem, size = 0x4000, scoped, tag = 'output window, operand 0']
    #allocation3 [shape = 's32[2]{0}', space=sflag, size = 0x8, scoped, tag = 'scoped memory for tpu_custom_call.1']
    %20 = vsyncpa [#allocation3], 0
    %s21 = scalar_lea.sflag [#allocation3], 1
    %22 = vsyncpa %s21, 0
    loop: start=0, step=1, limit=4
    $region2: #{tpu_custom_call.1} parent=1 // loop_pre_header
      _
    $region3: #{tpu_custom_call.1} parent=1 // loop_header
      %s24 = sphi 0, %s28
      %p25 = scmp.ge.s32.totalorder %s24, 4
      %s34 = sphi 0, %s36
      %s37 = sphi 0, %s34
      %s38 = sphi 0, %s37
      %s54 = sphi 0, %s38
      %s60 = sphi 0, %s62
      %s63 = sphi 0, %s60
      %s64 = sphi 0, %s63
      %s80 = sphi 0, %s64
      %s84 = sphi 0, %s84
      %s86 = sphi 0, %s84
      %s87 = sphi 0, %s86
      %s101 = sphi 0, %s87
      %s105 = sphi 0, %s105
      %s107 = sphi 0, %s105
      %s108 = sphi 0, %s107
      %s122 = sphi 0, %s108
      %s126 = sphi 0, %s126
      %s128 = sphi 0, %s126
      %s129 = sphi 0, %s128
      %s143 = sphi 0, %s129
      %s147 = sphi 0, %s147
      %s149 = sphi 0, %s147
      %s150 = sphi 0, %s149
      %s164 = sphi 0, %s150
      %s168 = sphi 0, %s168
      %s170 = sphi 0, %s168
      %s171 = sphi 0, %s170
      %s185 = sphi 0, %s171
      %s189 = sphi 0, %s189
      %s191 = sphi 0, %s189
      %s192 = sphi 0, %s191
      %s206 = sphi 0, %s192
      %s210 = sphi 0, %s210
      %s212 = sphi 0, %s210
      %s213 = sphi 0, %s212
      %s227 = sphi 0, %s213
      %s231 = sphi 0, %s231
      %s233 = sphi 0, %s231
      %s234 = sphi 0, %s233
      %s248 = sphi 0, %s234
      %s252 = sphi 0, %s252
      %s254 = sphi 0, %s252
      %s255 = sphi 0, %s254
      %s269 = sphi 0, %s255
      %s273 = sphi 0, %s273
      %s275 = sphi 0, %s273
      %s276 = sphi 0, %s275
      %s290 = sphi 0, %s276
      %s294 = sphi 0, %s294
      %s296 = sphi 0, %s294
      %s297 = sphi 0, %s296
      %s311 = sphi 0, %s297
      %s315 = sphi 0, %s315
      %s317 = sphi 0, %s315
      %s318 = sphi 0, %s317
      %s332 = sphi 0, %s318
      %s336 = sphi 0, %s336
      %s338 = sphi 0, %s336
      %s339 = sphi 0, %s338
      %s353 = sphi 0, %s339
      %s359 = sphi 0, %s361
      %s362 = sphi 0, %s359
      %s363 = sphi 0, %s362
      %s379 = sphi 0, %s363
    $region4: #{tpu_custom_call.1} parent=1 // loop_header_branch
      %27 = sbr.rel (%p25) target = $region8
    $region5: #{tpu_custom_call.1} parent=1 // loop_body
      %s29 = ssub.s32 %s24, 1
      %s30 = ssub.s32 %s24, 2
      %s31 = sadd.s32 %s24, 1
      %s32 = ssub.s32 %s24, %s31
      %p33 = scmp.eq.s32.totalorder %s32, 0
      %s35 = sadd.s32 %s34, 1
      %s36 = scalar_select %p33, %s34, %s35
      %p39 = pneg %p33
      %p40 = scmp.eq.s32.totalorder %s24, 1
      %p41 = por %p39, %p40
      %p42 = scmp.ne.s32.totalorder %s34, %s37
      %p43 = scmp.eq.s32.totalorder %s24, 0
      %p44 = por %p42, %p43
      %p45 = scmp.ne.s32.totalorder %s34, %s37
      %p46 = scmp.eq.s32.totalorder %s29, 1
      %p47 = por %p45, %p46
      %p48 = scmp.ne.s32.totalorder %s37, %s38
      %p49 = scmp.eq.s32.totalorder %s29, 0
      %p50 = por %p48, %p49
      %p51 = scmp.ne.s32.totalorder %s37, %s38
      %p52 = scmp.eq.s32.totalorder %s30, 1
      %p53 = por %p51, %p52
      %p55 = scmp.ne.s32.totalorder %s38, %s54
      %p56 = scmp.eq.s32.totalorder %s30, 0
      %p57 = por %p55, %p56
      %s58 = ssub.s32 %s24, %s31
      %p59 = scmp.eq.s32.totalorder %s58, 0
      %s61 = sadd.s32 %s60, 1
      %s62 = scalar_select %p59, %s60, %s61
      %p65 = pneg %p59
      %p66 = scmp.eq.s32.totalorder %s24, 1
      %p67 = por %p65, %p66
      %p68 = scmp.ne.s32.totalorder %s60, %s63
      %p69 = scmp.eq.s32.totalorder %s24, 0
      %p70 = por %p68, %p69
      %p71 = scmp.ne.s32.totalorder %s60, %s63
      %p72 = scmp.eq.s32.totalorder %s29, 1
      %p73 = por %p71, %p72
      %p74 = scmp.ne.s32.totalorder %s63, %s64
      %p75 = scmp.eq.s32.totalorder %s29, 0
      %p76 = por %p74, %p75
      %p77 = scmp.ne.s32.totalorder %s63, %s64
      %p78 = scmp.eq.s32.totalorder %s30, 1
      %p79 = por %p77, %p78
      %p81 = scmp.ne.s32.totalorder %s64, %s80
      %p82 = scmp.eq.s32.totalorder %s30, 0
      %p83 = por %p81, %p82
      %s85 = sadd.s32 %s84, 1
      %p88 = scmp.eq.s32.totalorder %s24, 1
      %p89 = scmp.ne.s32.totalorder %s84, %s86
      %p90 = scmp.eq.s32.totalorder %s24, 0
      %p91 = por %p89, %p90
      %p92 = scmp.ne.s32.totalorder %s84, %s86
      %p93 = scmp.eq.s32.totalorder %s29, 1
      %p94 = por %p92, %p93
      %p95 = scmp.ne.s32.totalorder %s86, %s87
      %p96 = scmp.eq.s32.totalorder %s29, 0
      %p97 = por %p95, %p96
      %p98 = scmp.ne.s32.totalorder %s86, %s87
      %p99 = scmp.eq.s32.totalorder %s30, 1
      %p100 = por %p98, %p99
      %p102 = scmp.ne.s32.totalorder %s87, %s101
      %p103 = scmp.eq.s32.totalorder %s30, 0
      %p104 = por %p102, %p103
      %s106 = sadd.s32 %s105, 1
      %p109 = scmp.eq.s32.totalorder %s24, 1
      %p110 = scmp.ne.s32.totalorder %s105, %s107
      %p111 = scmp.eq.s32.totalorder %s24, 0
      %p112 = por %p110, %p111
      %p113 = scmp.ne.s32.totalorder %s105, %s107
      %p114 = scmp.eq.s32.totalorder %s29, 1
      %p115 = por %p113, %p114
      %p116 = scmp.ne.s32.totalorder %s107, %s108
      %p117 = scmp.eq.s32.totalorder %s29, 0
      %p118 = por %p116, %p117
      %p119 = scmp.ne.s32.totalorder %s107, %s108
      %p120 = scmp.eq.s32.totalorder %s30, 1
      %p121 = por %p119, %p120
      %p123 = scmp.ne.s32.totalorder %s108, %s122
      %p124 = scmp.eq.s32.totalorder %s30, 0
      %p125 = por %p123, %p124
      %s127 = sadd.s32 %s126, 1
      %p130 = scmp.eq.s32.totalorder %s24, 1
      %p131 = scmp.ne.s32.totalorder %s126, %s128
      %p132 = scmp.eq.s32.totalorder %s24, 0
      %p133 = por %p131, %p132
      %p134 = scmp.ne.s32.totalorder %s126, %s128
      %p135 = scmp.eq.s32.totalorder %s29, 1
      %p136 = por %p134, %p135
      %p137 = scmp.ne.s32.totalorder %s128, %s129
      %p138 = scmp.eq.s32.totalorder %s29, 0
      %p139 = por %p137, %p138
      %p140 = scmp.ne.s32.totalorder %s128, %s129
      %p141 = scmp.eq.s32.totalorder %s30, 1
      %p142 = por %p140, %p141
      %p144 = scmp.ne.s32.totalorder %s129, %s143
      %p145 = scmp.eq.s32.totalorder %s30, 0
      %p146 = por %p144, %p145
      %s148 = sadd.s32 %s147, 1
      %p151 = scmp.eq.s32.totalorder %s24, 1
      %p152 = scmp.ne.s32.totalorder %s147, %s149
      %p153 = scmp.eq.s32.totalorder %s24, 0
      %p154 = por %p152, %p153
      %p155 = scmp.ne.s32.totalorder %s147, %s149
      %p156 = scmp.eq.s32.totalorder %s29, 1
      %p157 = por %p155, %p156
      %p158 = scmp.ne.s32.totalorder %s149, %s150
      %p159 = scmp.eq.s32.totalorder %s29, 0
      %p160 = por %p158, %p159
      %p161 = scmp.ne.s32.totalorder %s149, %s150
      %p162 = scmp.eq.s32.totalorder %s30, 1
      %p163 = por %p161, %p162
      %p165 = scmp.ne.s32.totalorder %s150, %s164
      %p166 = scmp.eq.s32.totalorder %s30, 0
      %p167 = por %p165, %p166
      %s169 = sadd.s32 %s168, 1
      %p172 = scmp.eq.s32.totalorder %s24, 1
      %p173 = scmp.ne.s32.totalorder %s168, %s170
      %p174 = scmp.eq.s32.totalorder %s24, 0
      %p175 = por %p173, %p174
      %p176 = scmp.ne.s32.totalorder %s168, %s170
      %p177 = scmp.eq.s32.totalorder %s29, 1
      %p178 = por %p176, %p177
      %p179 = scmp.ne.s32.totalorder %s170, %s171
      %p180 = scmp.eq.s32.totalorder %s29, 0
      %p181 = por %p179, %p180
      %p182 = scmp.ne.s32.totalorder %s170, %s171
      %p183 = scmp.eq.s32.totalorder %s30, 1
      %p184 = por %p182, %p183
      %p186 = scmp.ne.s32.totalorder %s171, %s185
      %p187 = scmp.eq.s32.totalorder %s30, 0
      %p188 = por %p186, %p187
      %s190 = sadd.s32 %s189, 1
      %p193 = scmp.eq.s32.totalorder %s24, 1
      %p194 = scmp.ne.s32.totalorder %s189, %s191
      %p195 = scmp.eq.s32.totalorder %s24, 0
      %p196 = por %p194, %p195
      %p197 = scmp.ne.s32.totalorder %s189, %s191
      %p198 = scmp.eq.s32.totalorder %s29, 1
      %p199 = por %p197, %p198
      %p200 = scmp.ne.s32.totalorder %s191, %s192
      %p201 = scmp.eq.s32.totalorder %s29, 0
      %p202 = por %p200, %p201
      %p203 = scmp.ne.s32.totalorder %s191, %s192
      %p204 = scmp.eq.s32.totalorder %s30, 1
      %p205 = por %p203, %p204
      %p207 = scmp.ne.s32.totalorder %s192, %s206
      %p208 = scmp.eq.s32.totalorder %s30, 0
      %p209 = por %p207, %p208
      %s211 = sadd.s32 %s210, 1
      %p214 = scmp.eq.s32.totalorder %s24, 1
      %p215 = scmp.ne.s32.totalorder %s210, %s212
      %p216 = scmp.eq.s32.totalorder %s24, 0
      %p217 = por %p215, %p216
      %p218 = scmp.ne.s32.totalorder %s210, %s212
      %p219 = scmp.eq.s32.totalorder %s29, 1
      %p220 = por %p218, %p219
      %p221 = scmp.ne.s32.totalorder %s212, %s213
      %p222 = scmp.eq.s32.totalorder %s29, 0
      %p223 = por %p221, %p222
      %p224 = scmp.ne.s32.totalorder %s212, %s213
      %p225 = scmp.eq.s32.totalorder %s30, 1
      %p226 = por %p224, %p225
      %p228 = scmp.ne.s32.totalorder %s213, %s227
      %p229 = scmp.eq.s32.totalorder %s30, 0
      %p230 = por %p228, %p229
      %s232 = sadd.s32 %s231, 1
      %p235 = scmp.eq.s32.totalorder %s24, 1
      %p236 = scmp.ne.s32.totalorder %s231, %s233
      %p237 = scmp.eq.s32.totalorder %s24, 0
      %p238 = por %p236, %p237
      %p239 = scmp.ne.s32.totalorder %s231, %s233
      %p240 = scmp.eq.s32.totalorder %s29, 1
      %p241 = por %p239, %p240
      %p242 = scmp.ne.s32.totalorder %s233, %s234
      %p243 = scmp.eq.s32.totalorder %s29, 0
      %p244 = por %p242, %p243
      %p245 = scmp.ne.s32.totalorder %s233, %s234
      %p246 = scmp.eq.s32.totalorder %s30, 1
      %p247 = por %p245, %p246
      %p249 = scmp.ne.s32.totalorder %s234, %s248
      %p250 = scmp.eq.s32.totalorder %s30, 0
      %p251 = por %p249, %p250
      %s253 = sadd.s32 %s252, 1
      %p256 = scmp.eq.s32.totalorder %s24, 1
      %p257 = scmp.ne.s32.totalorder %s252, %s254
      %p258 = scmp.eq.s32.totalorder %s24, 0
      %p259 = por %p257, %p258
      %p260 = scmp.ne.s32.totalorder %s252, %s254
      %p261 = scmp.eq.s32.totalorder %s29, 1
      %p262 = por %p260, %p261
      %p263 = scmp.ne.s32.totalorder %s254, %s255
      %p264 = scmp.eq.s32.totalorder %s29, 0
      %p265 = por %p263, %p264
      %p266 = scmp.ne.s32.totalorder %s254, %s255
      %p267 = scmp.eq.s32.totalorder %s30, 1
      %p268 = por %p266, %p267
      %p270 = scmp.ne.s32.totalorder %s255, %s269
      %p271 = scmp.eq.s32.totalorder %s30, 0
      %p272 = por %p270, %p271
      %s274 = sadd.s32 %s273, 1
      %p277 = scmp.eq.s32.totalorder %s24, 1
      %p278 = scmp.ne.s32.totalorder %s273, %s275
      %p279 = scmp.eq.s32.totalorder %s24, 0
      %p280 = por %p278, %p279
      %p281 = scmp.ne.s32.totalorder %s273, %s275
      %p282 = scmp.eq.s32.totalorder %s29, 1
      %p283 = por %p281, %p282
      %p284 = scmp.ne.s32.totalorder %s275, %s276
      %p285 = scmp.eq.s32.totalorder %s29, 0
      %p286 = por %p284, %p285
      %p287 = scmp.ne.s32.totalorder %s275, %s276
      %p288 = scmp.eq.s32.totalorder %s30, 1
      %p289 = por %p287, %p288
      %p291 = scmp.ne.s32.totalorder %s276, %s290
      %p292 = scmp.eq.s32.totalorder %s30, 0
      %p293 = por %p291, %p292
      %s295 = sadd.s32 %s294, 1
      %p298 = scmp.eq.s32.totalorder %s24, 1
      %p299 = scmp.ne.s32.totalorder %s294, %s296
      %p300 = scmp.eq.s32.totalorder %s24, 0
      %p301 = por %p299, %p300
      %p302 = scmp.ne.s32.totalorder %s294, %s296
      %p303 = scmp.eq.s32.totalorder %s29, 1
      %p304 = por %p302, %p303
      %p305 = scmp.ne.s32.totalorder %s296, %s297
      %p306 = scmp.eq.s32.totalorder %s29, 0
      %p307 = por %p305, %p306
      %p308 = scmp.ne.s32.totalorder %s296, %s297
      %p309 = scmp.eq.s32.totalorder %s30, 1
      %p310 = por %p308, %p309
      %p312 = scmp.ne.s32.totalorder %s297, %s311
      %p313 = scmp.eq.s32.totalorder %s30, 0
      %p314 = por %p312, %p313
      %s316 = sadd.s32 %s315, 1
      %p319 = scmp.eq.s32.totalorder %s24, 1
      %p320 = scmp.ne.s32.totalorder %s315, %s317
      %p321 = scmp.eq.s32.totalorder %s24, 0
      %p322 = por %p320, %p321
      %p323 = scmp.ne.s32.totalorder %s315, %s317
      %p324 = scmp.eq.s32.totalorder %s29, 1
      %p325 = por %p323, %p324
      %p326 = scmp.ne.s32.totalorder %s317, %s318
      %p327 = scmp.eq.s32.totalorder %s29, 0
      %p328 = por %p326, %p327
      %p329 = scmp.ne.s32.totalorder %s317, %s318
      %p330 = scmp.eq.s32.totalorder %s30, 1
      %p331 = por %p329, %p330
      %p333 = scmp.ne.s32.totalorder %s318, %s332
      %p334 = scmp.eq.s32.totalorder %s30, 0
      %p335 = por %p333, %p334
      %s337 = sadd.s32 %s336, 1
      %p340 = scmp.eq.s32.totalorder %s24, 1
      %p341 = scmp.ne.s32.totalorder %s336, %s338
      %p342 = scmp.eq.s32.totalorder %s24, 0
      %p343 = por %p341, %p342
      %p344 = scmp.ne.s32.totalorder %s336, %s338
      %p345 = scmp.eq.s32.totalorder %s29, 1
      %p346 = por %p344, %p345
      %p347 = scmp.ne.s32.totalorder %s338, %s339
      %p348 = scmp.eq.s32.totalorder %s29, 0
      %p349 = por %p347, %p348
      %p350 = scmp.ne.s32.totalorder %s338, %s339
      %p351 = scmp.eq.s32.totalorder %s30, 1
      %p352 = por %p350, %p351
      %p354 = scmp.ne.s32.totalorder %s339, %s353
      %p355 = scmp.eq.s32.totalorder %s30, 0
      %p356 = por %p354, %p355
      %s357 = ssub.s32 %s24, %s31
      %p358 = scmp.eq.s32.totalorder %s357, 0
      %s360 = sadd.s32 %s359, 1
      %s361 = scalar_select %p358, %s359, %s360
      %p364 = pneg %p358
      %p365 = scmp.eq.s32.totalorder %s24, 1
      %p366 = por %p364, %p365
      %p367 = scmp.ne.s32.totalorder %s359, %s362
      %p368 = scmp.eq.s32.totalorder %s24, 0
      %p369 = por %p367, %p368
      %p370 = scmp.ne.s32.totalorder %s359, %s362
      %p371 = scmp.eq.s32.totalorder %s29, 1
      %p372 = por %p370, %p371
      %p373 = scmp.ne.s32.totalorder %s362, %s363
      %p374 = scmp.eq.s32.totalorder %s29, 0
      %p375 = por %p373, %p374
      %p376 = scmp.ne.s32.totalorder %s362, %s363
      %p377 = scmp.eq.s32.totalorder %s30, 1
      %p378 = por %p376, %p377
      %p380 = scmp.ne.s32.totalorder %s363, %s379
      %p381 = scmp.eq.s32.totalorder %s30, 0
      %p382 = por %p380, %p381
      %p383 = scmp.le.s32.totalorder 1, %s24
      %p384 = scmp.lt.s32.totalorder %s24, 3
      %p385 = pnand %p383, %p384
      %p386 = pneg %p385
      // Predicated region
      $region9: #{tpu_custom_call.1} parent=5 // pred_check
        _
      $region10: #{tpu_custom_call.1} parent=5 // pred_check_branch
        %388 = sbr.rel (%p385) target = $region12
      $region11: #{tpu_custom_call.1} parent=5 // pred_region
        %s389 = ssub.s32 %s24, 1
        // Predicated region
        $region13: #{tpu_custom_call.1} parent=11 // pred_check
          %p390 = pneg %p97
        $region14: #{tpu_custom_call.1} parent=11 // pred_check_branch
          %392 = sbr.rel (%p390) target = $region16
        $region15: #{tpu_custom_call.1} parent=11 // pred_region
          _
        $region16: #{tpu_custom_call.1} parent=11 // pred_fallthru
          _
        // Predicated region
        $region17: #{tpu_custom_call.1} parent=11 // pred_check
          %p393 = pneg %p118
        $region18: #{tpu_custom_call.1} parent=11 // pred_check_branch
          %395 = sbr.rel (%p393) target = $region20
        $region19: #{tpu_custom_call.1} parent=11 // pred_region
          _
        $region20: #{tpu_custom_call.1} parent=11 // pred_fallthru
          _
        // Predicated region
        $region21: #{tpu_custom_call.1} parent=11 // pred_check
          %p396 = pneg %p139
        $region22: #{tpu_custom_call.1} parent=11 // pred_check_branch
          %398 = sbr.rel (%p396) target = $region24
        $region23: #{tpu_custom_call.1} parent=11 // pred_region
          _
        $region24: #{tpu_custom_call.1} parent=11 // pred_fallthru
          _
        // Predicated region
        $region25: #{tpu_custom_call.1} parent=11 // pred_check
          %p399 = pneg %p160
        $region26: #{tpu_custom_call.1} parent=11 // pred_check_branch
          %401 = sbr.rel (%p399) target = $region28
        $region27: #{tpu_custom_call.1} parent=11 // pred_region
          _
        $region28: #{tpu_custom_call.1} parent=11 // pred_fallthru
          _
        // Predicated region
        $region29: #{tpu_custom_call.1} parent=11 // pred_check
          %p402 = pneg %p181
        $region30: #{tpu_custom_call.1} parent=11 // pred_check_branch
          %404 = sbr.rel (%p402) target = $region32
        $region31: #{tpu_custom_call.1} parent=11 // pred_region
          _
        $region32: #{tpu_custom_call.1} parent=11 // pred_fallthru
          _
        // Predicated region
        $region33: #{tpu_custom_call.1} parent=11 // pred_check
          %p405 = pneg %p202
        $region34: #{tpu_custom_call.1} parent=11 // pred_check_branch
          %407 = sbr.rel (%p405) target = $region36
        $region35: #{tpu_custom_call.1} parent=11 // pred_region
          _
        $region36: #{tpu_custom_call.1} parent=11 // pred_fallthru
          _
        // Predicated region
        $region37: #{tpu_custom_call.1} parent=11 // pred_check
          %p408 = pneg %p223
        $region38: #{tpu_custom_call.1} parent=11 // pred_check_branch
          %410 = sbr.rel (%p408) target = $region40
        $region39: #{tpu_custom_call.1} parent=11 // pred_region
          _
        $region40: #{tpu_custom_call.1} parent=11 // pred_fallthru
          _
        // Predicated region
        $region41: #{tpu_custom_call.1} parent=11 // pred_check
          %p411 = pneg %p244
        $region42: #{tpu_custom_call.1} parent=11 // pred_check_branch
          %413 = sbr.rel (%p411) target = $region44
        $region43: #{tpu_custom_call.1} parent=11 // pred_region
          _
        $region44: #{tpu_custom_call.1} parent=11 // pred_fallthru
          _
        // Predicated region
        $region45: #{tpu_custom_call.1} parent=11 // pred_check
          %p414 = pneg %p265
        $region46: #{tpu_custom_call.1} parent=11 // pred_check_branch
          %416 = sbr.rel (%p414) target = $region48
        $region47: #{tpu_custom_call.1} parent=11 // pred_region
          _
        $region48: #{tpu_custom_call.1} parent=11 // pred_fallthru
          _
        // Predicated region
        $region49: #{tpu_custom_call.1} parent=11 // pred_check
          %p417 = pneg %p286
        $region50: #{tpu_custom_call.1} parent=11 // pred_check_branch
          %419 = sbr.rel (%p417) target = $region52
        $region51: #{tpu_custom_call.1} parent=11 // pred_region
          _
        $region52: #{tpu_custom_call.1} parent=11 // pred_fallthru
          _
        // Predicated region
        $region53: #{tpu_custom_call.1} parent=11 // pred_check
          %p420 = pneg %p307
        $region54: #{tpu_custom_call.1} parent=11 // pred_check_branch
          %422 = sbr.rel (%p420) target = $region56
        $region55: #{tpu_custom_call.1} parent=11 // pred_region
          _
        $region56: #{tpu_custom_call.1} parent=11 // pred_fallthru
          _
        // Predicated region
        $region57: #{tpu_custom_call.1} parent=11 // pred_check
          %p423 = pneg %p328
        $region58: #{tpu_custom_call.1} parent=11 // pred_check_branch
          %425 = sbr.rel (%p423) target = $region60
        $region59: #{tpu_custom_call.1} parent=11 // pred_region
          _
        $region60: #{tpu_custom_call.1} parent=11 // pred_fallthru
          _
        // Predicated region
        $region61: #{tpu_custom_call.1} parent=11 // pred_check
          %p426 = pneg %p349
        $region62: #{tpu_custom_call.1} parent=11 // pred_check_branch
          %428 = sbr.rel (%p426) target = $region64
        $region63: #{tpu_custom_call.1} parent=11 // pred_region
          _
        $region64: #{tpu_custom_call.1} parent=11 // pred_fallthru
          _
      $region12: #{tpu_custom_call.1} parent=5 // pred_fallthru
        _
      %p429 = scmp.lt.s32.totalorder %s24, 2
      // Predicated region
      $region65: #{tpu_custom_call.1} parent=5 // pred_check
        %p430 = pneg %p429
      $region66: #{tpu_custom_call.1} parent=5 // pred_check_branch
        %432 = sbr.rel (%p430) target = $region68
      $region67: #{tpu_custom_call.1} parent=5 // pred_region
        // Predicated region
        $region69: #{tpu_custom_call.1} parent=67 // pred_check
          %p433 = pneg %p44
        $region70: #{tpu_custom_call.1} parent=67 // pred_check_branch
          %435 = sbr.rel (%p433) target = $region72
        $region71: #{tpu_custom_call.1} parent=67 // pred_region
          %p436 = scmp.lt.s32.totalorder %s24, 1
          %s437 = scalar_select %p436, %s24, 1
          %s438 = smul.addr %s437, 2
          %s439 = smul.addr %s438, 4
          %s440 = scalar_lea.vmem %s0, %s439
        $region72: #{tpu_custom_call.1} parent=67 // pred_fallthru
          _
        // Predicated region
        $region73: #{tpu_custom_call.1} parent=67 // pred_check
          %p441 = pneg %p70
        $region74: #{tpu_custom_call.1} parent=67 // pred_check_branch
          %443 = sbr.rel (%p441) target = $region76
        $region75: #{tpu_custom_call.1} parent=67 // pred_region
          %p444 = scmp.lt.s32.totalorder %s24, 1
          %s445 = scalar_select %p444, %s24, 1
          %s446 = scalar_lea.vmem %s1, %s445
        $region76: #{tpu_custom_call.1} parent=67 // pred_fallthru
          _
      $region68: #{tpu_custom_call.1} parent=5 // pred_fallthru
        _
      %p447 = scmp.le.s32.totalorder 1, %s24
      %p448 = scmp.lt.s32.totalorder %s24, 3
      %p449 = pnand %p447, %p448
      %p450 = pneg %p449
      // Predicated region
      $region77: #{tpu_custom_call.1} parent=5 // pred_check
        _
      $region78: #{tpu_custom_call.1} parent=5 // pred_check_branch
        %452 = sbr.rel (%p449) target = $region80
      $region79: #{tpu_custom_call.1} parent=5 // pred_region
        %s453 = ssub.s32 %s24, 1
        %p454 = scmp.lt.s32.totalorder %s29, 1
        %s455 = scalar_select %p454, %s29, 1
        %s456 = smul.addr %s455, 2
        %s457 = smul.addr %s456, 4
        %s458 = scalar_lea.vmem %s0, %s457
        %p459 = pneg %p50
        %p460 = pneg %p47
        %p461 = scmp.lt.s32.totalorder %s29, 1
        %s462 = scalar_select %p461, %s29, 1
        %s463 = scalar_lea.vmem %s1, %s462
        %p464 = pneg %p76
        %p465 = pneg %p73
        %p466 = pneg %p97
        %p467 = pneg %p94
        %p468 = pneg %p118
        %p469 = pneg %p115
        %p470 = pneg %p139
        %p471 = pneg %p136
        %p472 = pneg %p160
        %p473 = pneg %p157
        %p474 = pneg %p181
        %p475 = pneg %p178
        %p476 = pneg %p202
        %p477 = pneg %p199
        %p478 = pneg %p223
        %p479 = pneg %p220
        %p480 = pneg %p244
        %p481 = pneg %p241
        %p482 = pneg %p265
        %p483 = pneg %p262
        %p484 = pneg %p286
        %p485 = pneg %p283
        %p486 = pneg %p307
        %p487 = pneg %p304
        %p488 = pneg %p328
        %p489 = pneg %p325
        %p490 = pneg %p349
        %p491 = pneg %p346
        %p492 = pneg %p375
        %p493 = pneg %p372
        %s494 = sand.u32 %s362, 1
        %s495 = scalar_lea.sflag [#allocation3], %s494
        %s496 = sand.u32 %s362, 1
        %s497 = smul.addr %s496, 16
        %s498 = scalar_lea.vmem [#allocation2], %s497
        %p499 = scmp.lt.s32.totalorder %s29, 1
        %s500 = scalar_select %p499, %s29, 1
        %s501 = smul.addr %s500, 2
        %s502 = smul.addr %s501, 4
        %s503 = scalar_lea.vmem %s0, %s502
        %p504 = scmp.lt.s32.totalorder %s29, 1
        %s505 = scalar_select %p504, %s29, 1
        %s506 = scalar_lea.vmem %s1, %s505
        %v508 = vld [vmem:[%s503] sm:$0xff]
        %v509 = vld [vmem:[%s2] sm:$0xff]
        %v510 = vld [vmem:[%s2 + $0x8] sm:$0xff]
        %v511 = vld [vmem:[%s2 + $0x10] sm:$0x1]
        %v512 = vld [vmem:[%s2 + $0x18] sm:$0x1]
        %v513 = vld [vmem:[%s5] sm:$0xf]
        %v514 = vld [vmem:[%s6] sm:$0xf]
        %516 = vst [vmem:[#allocation1] ss:$2 sm:$0xff] %v508
        %v517 = vld.sshfl [vmem:[#allocation1] sm:$0xff pattern:$0x75316420]
        %v518 = vld.sshfl [vmem:[#allocation1 + $0x8] sm:$0xff pattern:$0x75316420]
        %vm521 = vcmask 1041408
        %v522 = vsel %vm521, %v517, 0.0
        %v523 = vsel %vm521, %v518, 0.0
        %v524 = vadd.f32 %v522, %v523
        %525 = vadd.xlane.f32.xlu0 %v524
        %v526 = vpop.xlane.xlu0 %525
        %v527 = vrot.slane %v526, 4
        %v528 = vadd.f32 %v526, %v527
        %v529 = vrot.slane %v528, 2
        %v530 = vadd.f32 %v528, %v529
        %v531 = vrot.slane %v530, 1
        %v532 = vadd.f32 %v530, %v531
        %s533 = vtos %v532
        %v534 = vstv %s533
        %v535 = vmul.f32 %v534, 0.001953125
        %v536 = vmul.f32 %v508, %v508
        %538 = vst [vmem:[#allocation1] ss:$2 sm:$0xff] %v536
        %v539 = vld.sshfl [vmem:[#allocation1] sm:$0xff pattern:$0x75316420]
        %v540 = vld.sshfl [vmem:[#allocation1 + $0x8] sm:$0xff pattern:$0x75316420]
        %v543 = vsel %vm521, %v539, 0.0
        %v544 = vsel %vm521, %v540, 0.0
        %v545 = vadd.f32 %v543, %v544
        %546 = vadd.xlane.f32.xlu0 %v545
        %v547 = vpop.xlane.xlu0 %546
        %v548 = vrot.slane %v547, 4
        %v549 = vadd.f32 %v547, %v548
        %v550 = vrot.slane %v549, 2
        %v551 = vadd.f32 %v549, %v550
        %v552 = vrot.slane %v551, 1
        %v553 = vadd.f32 %v551, %v552
        %s554 = vtos %v553
        %v555 = vstv %s554
        %v556 = vmul.f32 %v555, 0.001953125
        %v557 = vmul.f32 %v535, %v535
        %v558 = vsub.f32 %v556, %v557
        %v559 = vsub.f32 %v508, %v535
        %v560 = vadd.f32 %v558, 1e-05
        %v561 = vrsqrt.pop %v560
        %v562 = vmul.f32 %v561, %v560
        %v563 = vmul.f32 %v562, %v561
        %v564 = vmul.f32 0.5, %v563
        %v565 = vsub.f32 1.5, %v564
        %v566 = vmul.f32 %v561, %v565
        %vm567 = vweird.f32 %v560
        %vm568 = vweird.f32 %v561
        %vm569 = vmor %vm567, %vm568
        %v570 = vsel %vm569, %v561, %v566
        %v571 = vmul.f32 %v559, %v570
        %572 = vst [vmem:[#allocation1] ss:$2 sm:$0xff] %v508
        %v573 = vld.sshfl [vmem:[#allocation1] sm:$0xff pattern:$0x75316420]
        %v574 = vld.sshfl [vmem:[#allocation1 + $0x8] sm:$0xff pattern:$0x75316420]
        %v575 = vrot.slane %v573, 2
        %v576 = vrot.slane %v574, 2
        %v579 = vsel %vm521, %v575, 0.0
        %v580 = vsel %vm521, %v576, 0.0
        %v581 = vadd.f32 %v579, %v580
        %582 = vadd.xlane.f32.xlu0 %v581
        %v583 = vpop.xlane.xlu0 %582
        %v584 = vrot.slane %v583, 4
        %v585 = vadd.f32 %v583, %v584
        %v586 = vrot.slane %v585, 2
        %v587 = vadd.f32 %v585, %v586
        %v588 = vrot.slane %v587, 1
        %v589 = vadd.f32 %v587, %v588
        %s590 = vtos %v589
        %v591 = vstv %s590
        %v592 = vmul.f32 %v591, 0.001953125
        %593 = vst [vmem:[#allocation1] ss:$2 sm:$0xff] %v536
        %v594 = vld.sshfl [vmem:[#allocation1] sm:$0xff pattern:$0x75316420]
        %v595 = vld.sshfl [vmem:[#allocation1 + $0x8] sm:$0xff pattern:$0x75316420]
        %v596 = vrot.slane %v594, 2
        %v597 = vrot.slane %v595, 2
        %v600 = vsel %vm521, %v596, 0.0
        %v601 = vsel %vm521, %v597, 0.0
        %v602 = vadd.f32 %v600, %v601
        %603 = vadd.xlane.f32.xlu0 %v602
        %v604 = vpop.xlane.xlu0 %603
        %v605 = vrot.slane %v604, 4
        %v606 = vadd.f32 %v604, %v605
        %v607 = vrot.slane %v606, 2
        %v608 = vadd.f32 %v606, %v607
        %v609 = vrot.slane %v608, 1
        %v610 = vadd.f32 %v608, %v609
        %s611 = vtos %v610
        %v612 = vstv %s611
        %v613 = vmul.f32 %v612, 0.001953125
        %v614 = vmul.f32 %v592, %v592
        %v615 = vsub.f32 %v613, %v614
        %v616 = vsub.f32 %v508, %v592
        %v617 = vadd.f32 %v615, 1e-05
        %v618 = vrsqrt.pop %v617
        %v619 = vmul.f32 %v618, %v617
        %v620 = vmul.f32 %v619, %v618
        %v621 = vmul.f32 0.5, %v620
        %v622 = vsub.f32 1.5, %v621
        %v623 = vmul.f32 %v618, %v622
        %vm624 = vweird.f32 %v617
        %vm625 = vweird.f32 %v618
        %vm626 = vmor %vm624, %vm625
        %v627 = vsel %vm626, %v618, %v623
        %v628 = vmul.f32 %v616, %v627
        %630 = vst [vmem:[#allocation1] ss:$2 sm:$0xff] %v571
        %v631 = vld.sshfl [vmem:[#allocation1] sm:$0xff pattern:$0x75316420]
        %v632 = vld.sshfl [vmem:[#allocation1 + $0x8] sm:$0xff pattern:$0x75316420]
        %636 = vst [vmem:[#allocation1] ss:$2 sm:$0xff] %v628
        %v637 = vld.sshfl [vmem:[#allocation1] sm:$0xff pattern:$0x75316420]
        %v638 = vld.sshfl [vmem:[#allocation1 + $0x8] sm:$0xff pattern:$0x75316420]
        %v641 = vsel %vm521, %v631, %v637
        %v642 = vsel %vm521, %v632, %v638
        %644 = vset.pattern.permute.xlu0 0
        %645 = vperm.xlu0 %644, %v513
        %v646 = vpop.permute.xlu0 %645
        %v648 = vmul.f32 %v641, %v646
        %v649 = vmul.f32 %v642, %v646
        %651 = vset.pattern.permute.xlu0 0
        %652 = vperm.xlu0 %651, %v514
        %v653 = vpop.permute.xlu0 %652
        %v655 = vadd.f32 %v648, %v653
        %v656 = vadd.f32 %v649, %v653
        %v657 = vxor.u32 %v655, 2147483648
        %v658 = vxor.u32 %v656, 2147483648
        %v659 = vmul.f32 %v657, 1.442695
        %v660 = vpow.pop %v659
        %v661 = vmul.f32 %v658, 1.442695
        %v662 = vpow.pop %v661
        %v663 = vadd.f32 %v660, 1.0
        %v664 = vadd.f32 %v662, 1.0
        %v665 = vrcp.pop %v663
        %v666 = vmul.f32 %v663, %v665
        %v667 = vsub.f32 1.0, %v666
        %v668 = vmul.f32 %v665, %v667
        %v669 = vadd.f32 %v665, %v668
        %vm670 = vweird.f32 %v663
        %vm671 = vweird.f32 %v665
        %vm672 = vmor %vm670, %vm671
        %v673 = vsel %vm672, %v665, %v669
        %v674 = vand.u32 2147483647, %v663
        %vm675 = vcmp.eq.f32.partialorder %v674, 8.507059e+37
        %v676 = vand.u32 %v663, 2147483648
        %v677 = vor.u32 1.1754944e-38, %v676
        %v678 = vsel %vm675, %v677, %v673
        %v679 = vmul.f32 1.0, %v678
        %v680 = vrcp.pop %v664
        %v681 = vmul.f32 %v664, %v680
        %v682 = vsub.f32 1.0, %v681
        %v683 = vmul.f32 %v680, %v682
        %v684 = vadd.f32 %v680, %v683
        %vm685 = vweird.f32 %v664
        %vm686 = vweird.f32 %v680
        %vm687 = vmor %vm685, %vm686
        %v688 = vsel %vm687, %v680, %v684
        %v689 = vand.u32 2147483647, %v664
        %vm690 = vcmp.eq.f32.partialorder %v689, 8.507059e+37
        %v691 = vand.u32 %v664, 2147483648
        %v692 = vor.u32 1.1754944e-38, %v691
        %v693 = vsel %vm690, %v692, %v688
        %v694 = vmul.f32 1.0, %v693
        %v695 = vmul.f32 %v655, %v679
        %v696 = vmul.f32 %v656, %v694
        %v697 = vld [vmem:[%s8] sm:$0xff]
        %698 = vrot.lane.b32.xlu0 %v695, 17
        %v699 = vpop.permute.xlu0 %698
        %700 = vrot.lane.b32.xlu0 %v696, 17
        %v701 = vpop.permute.xlu0 %700
        %v702 = vlaneseq
        %v703 = vand.u32 %v702, 127
        %vm704 = vcmp.lt.s32.totalorder %v703, 17
        %v705 = vsel %vm704, %v699, %v701
        %v706 = vsel %vm704, %v701, %v699
        %v707 = vperm.slane %v509, 0
        %v708 = vperm.slane %v510, 0
        %v709 = vmul.f32 %v706, %v707
        %v710 = vmul.f32 %v705, %v708
        %v711 = vld [vmem:[%s7] sm:$0xf]
        %v712 = vpack.c.bf16 %v709, %v709
        %v713 = vpack.c.bf16 %v710, %v710
        %714 = vrot.lane.b32.xlu0 %v695, 16
        %v715 = vpop.permute.xlu0 %714
        %716 = vrot.lane.b32.xlu0 %v696, 16
        %v717 = vpop.permute.xlu0 %716
        %vm718 = vcmp.lt.s32.totalorder %v703, 16
        %v719 = vsel %vm718, %v715, %v717
        %v720 = vsel %vm718, %v717, %v715
        %v721 = vperm.slane %v509, 1
        %v722 = vperm.slane %v510, 1
        %v723 = vmul.f32 %v720, %v721
        %v724 = vmul.f32 %v719, %v722
        %s725 = scalar_lea.vmem %s7, 4
        %v726 = vld [vmem:[%s725] sm:$0xf]
        %v727 = vpack.c.bf16 %v723, %v723
        %v728 = vpack.c.bf16 %v724, %v724
        %vm729 = vcmask 31744
        %v731 = vsel %vm729, %v726, 0
        %v734 = vsel %vm521, %v727, 0
        %v737 = vsel %vm521, %v728, 0
        %739 = vmatpush.bf16.msra.mxu0 0
        %740 = vmatpush.bf16.msra.mxu0 0
        %741 = vmatpush.bf16.msra.mxu0 0
        %742 = vmatpush.bf16.msra.mxu0 0
        %743 = vmatpush.bf16.msra.mxu0 0
        %744 = vmatpush.bf16.msra.mxu0 0
        %745 = vmatpush.bf16.msra.mxu0 0
        %746 = vmatpush.bf16.msra.mxu0 %v734
        %747 = vmatmul.bf16.gmra.mxu0 %v731
        %v748 = vpop.f32.mrf.mxu0
        %v749 = vadd.f32 0.0, %v748
        %v750 = vpop.f32.mrf.mxu0
        %751 = vdwg.mxu0
        %752 = vmatpush.bf16.msra.mxu0 0
        %753 = vmatpush.bf16.msra.mxu0 0
        %754 = vmatpush.bf16.msra.mxu0 0
        %755 = vmatpush.bf16.msra.mxu0 0
        %756 = vmatpush.bf16.msra.mxu0 0
        %757 = vmatpush.bf16.msra.mxu0 0
        %758 = vmatpush.bf16.msra.mxu0 0
        %759 = vmatpush.bf16.msra.mxu0 %v737
        %760 = vmatmul.bf16.gmra.mxu0 %v731
        %v761 = vpop.f32.mrf.mxu0
        %v762 = vadd.f32 0.0, %v761
        %v763 = vpop.f32.mrf.mxu0
        %764 = vdwg.mxu0
        %v766 = vsel %vm729, %v711, 0
        %v769 = vsel %vm521, %v712, 0
        %v772 = vsel %vm521, %v713, 0
        %774 = vmatpush.bf16.msra.mxu0 0
        %775 = vmatpush.bf16.msra.mxu0 0
        %776 = vmatpush.bf16.msra.mxu0 0
        %777 = vmatpush.bf16.msra.mxu0 0
        %778 = vmatpush.bf16.msra.mxu0 0
        %779 = vmatpush.bf16.msra.mxu0 0
        %780 = vmatpush.bf16.msra.mxu0 0
        %781 = vmatpush.bf16.msra.mxu0 %v769
        %782 = vmatmul.bf16.gmra.mxu0 %v766
        %v783 = vpop.f32.mrf.mxu0
        %v784 = vadd.f32 %v749, %v783
        %v785 = vpop.f32.mrf.mxu0
        %786 = vdwg.mxu0
        %787 = vmatpush.bf16.msra.mxu0 0
        %788 = vmatpush.bf16.msra.mxu0 0
        %789 = vmatpush.bf16.msra.mxu0 0
        %790 = vmatpush.bf16.msra.mxu0 0
        %791 = vmatpush.bf16.msra.mxu0 0
        %792 = vmatpush.bf16.msra.mxu0 0
        %793 = vmatpush.bf16.msra.mxu0 0
        %794 = vmatpush.bf16.msra.mxu0 %v772
        %795 = vmatmul.bf16.gmra.mxu0 %v766
        %v796 = vpop.f32.mrf.mxu0
        %v797 = vadd.f32 %v762, %v796
        %v798 = vpop.f32.mrf.mxu0
        %799 = vdwg.mxu0
        %800 = vrot.lane.b32.xlu0 %v695, 15
        %v801 = vpop.permute.xlu0 %800
        %802 = vrot.lane.b32.xlu0 %v696, 15
        %v803 = vpop.permute.xlu0 %802
        %vm804 = vcmp.lt.s32.totalorder %v703, 15
        %v805 = vsel %vm804, %v801, %v803
        %v806 = vsel %vm804, %v803, %v801
        %v807 = vperm.slane %v509, 2
        %v808 = vperm.slane %v510, 2
        %v809 = vmul.f32 %v806, %v807
        %v810 = vmul.f32 %v805, %v808
        %s811 = scalar_lea.vmem %s7, 8
        %v812 = vld [vmem:[%s811] sm:$0xf]
        %v813 = vpack.c.bf16 %v809, %v809
        %v814 = vpack.c.bf16 %v810, %v810
        %v816 = vsel %vm729, %v812, 0
        %v819 = vsel %vm521, %v813, 0
        %v822 = vsel %vm521, %v814, 0
        %824 = vmatpush.bf16.msra.mxu0 0
        %825 = vmatpush.bf16.msra.mxu0 0
        %826 = vmatpush.bf16.msra.mxu0 0
        %827 = vmatpush.bf16.msra.mxu0 0
        %828 = vmatpush.bf16.msra.mxu0 0
        %829 = vmatpush.bf16.msra.mxu0 0
        %830 = vmatpush.bf16.msra.mxu0 0
        %831 = vmatpush.bf16.msra.mxu0 %v819
        %832 = vmatmul.bf16.gmra.mxu0 %v816
        %v833 = vpop.f32.mrf.mxu0
        %v834 = vadd.f32 0.0, %v833
        %v835 = vpop.f32.mrf.mxu0
        %836 = vdwg.mxu0
        %837 = vmatpush.bf16.msra.mxu0 0
        %838 = vmatpush.bf16.msra.mxu0 0
        %839 = vmatpush.bf16.msra.mxu0 0
        %840 = vmatpush.bf16.msra.mxu0 0
        %841 = vmatpush.bf16.msra.mxu0 0
        %842 = vmatpush.bf16.msra.mxu0 0
        %843 = vmatpush.bf16.msra.mxu0 0
        %844 = vmatpush.bf16.msra.mxu0 %v822
        %845 = vmatmul.bf16.gmra.mxu0 %v816
        %v846 = vpop.f32.mrf.mxu0
        %v847 = vadd.f32 0.0, %v846
        %v848 = vpop.f32.mrf.mxu0
        %849 = vdwg.mxu0
        %v850 = vadd.f32 %v784, %v834
        %v851 = vadd.f32 %v797, %v847
        %852 = vrot.lane.b32.xlu0 %v695, 1
        %v853 = vpop.permute.xlu0 %852
        %854 = vrot.lane.b32.xlu0 %v696, 1
        %v855 = vpop.permute.xlu0 %854
        %vm856 = vcmp.lt.s32.totalorder %v703, 1
        %v857 = vsel %vm856, %v853, %v855
        %v858 = vsel %vm856, %v855, %v853
        %v859 = vperm.slane %v509, 3
        %v860 = vperm.slane %v510, 3
        %v861 = vmul.f32 %v858, %v859
        %v862 = vmul.f32 %v857, %v860
        %s863 = scalar_lea.vmem %s7, 12
        %v864 = vld [vmem:[%s863] sm:$0xf]
        %v865 = vpack.c.bf16 %v861, %v861
        %v866 = vpack.c.bf16 %v862, %v862
        %v868 = vsel %vm729, %v864, 0
        %v871 = vsel %vm521, %v865, 0
        %v874 = vsel %vm521, %v866, 0
        %876 = vmatpush.bf16.msra.mxu0 0
        %877 = vmatpush.bf16.msra.mxu0 0
        %878 = vmatpush.bf16.msra.mxu0 0
        %879 = vmatpush.bf16.msra.mxu0 0
        %880 = vmatpush.bf16.msra.mxu0 0
        %881 = vmatpush.bf16.msra.mxu0 0
        %882 = vmatpush.bf16.msra.mxu0 0
        %883 = vmatpush.bf16.msra.mxu0 %v871
        %884 = vmatmul.bf16.gmra.mxu0 %v868
        %v885 = vpop.f32.mrf.mxu0
        %v886 = vadd.f32 0.0, %v885
        %v887 = vpop.f32.mrf.mxu0
        %888 = vdwg.mxu0
        %889 = vmatpush.bf16.msra.mxu0 0
        %890 = vmatpush.bf16.msra.mxu0 0
        %891 = vmatpush.bf16.msra.mxu0 0
        %892 = vmatpush.bf16.msra.mxu0 0
        %893 = vmatpush.bf16.msra.mxu0 0
        %894 = vmatpush.bf16.msra.mxu0 0
        %895 = vmatpush.bf16.msra.mxu0 0
        %896 = vmatpush.bf16.msra.mxu0 %v874
        %897 = vmatmul.bf16.gmra.mxu0 %v868
        %v898 = vpop.f32.mrf.mxu0
        %v899 = vadd.f32 0.0, %v898
        %v900 = vpop.f32.mrf.mxu0
        %901 = vdwg.mxu0
        %v902 = vadd.f32 %v850, %v886
        %v903 = vadd.f32 %v851, %v899
        %s904 = scalar_lea.vmem %s7, 16
        %v905 = vld [vmem:[%s904] sm:$0xf]
        %v906 = vpack.c.bf16 %v695, %v695
        %v907 = vpack.c.bf16 %v696, %v696
        %v909 = vsel %vm729, %v905, 0
        %v912 = vsel %vm521, %v906, 0
        %v915 = vsel %vm521, %v907, 0
        %917 = vmatpush.bf16.msra.mxu0 0
        %918 = vmatpush.bf16.msra.mxu0 0
        %919 = vmatpush.bf16.msra.mxu0 0
        %920 = vmatpush.bf16.msra.mxu0 0
        %921 = vmatpush.bf16.msra.mxu0 0
        %922 = vmatpush.bf16.msra.mxu0 0
        %923 = vmatpush.bf16.msra.mxu0 0
        %924 = vmatpush.bf16.msra.mxu0 %v912
        %925 = vmatmul.bf16.gmra.mxu0 %v909
        %v926 = vpop.f32.mrf.mxu0
        %v927 = vadd.f32 0.0, %v926
        %v928 = vpop.f32.mrf.mxu0
        %929 = vdwg.mxu0
        %930 = vmatpush.bf16.msra.mxu0 0
        %931 = vmatpush.bf16.msra.mxu0 0
        %932 = vmatpush.bf16.msra.mxu0 0
        %933 = vmatpush.bf16.msra.mxu0 0
        %934 = vmatpush.bf16.msra.mxu0 0
        %935 = vmatpush.bf16.msra.mxu0 0
        %936 = vmatpush.bf16.msra.mxu0 0
        %937 = vmatpush.bf16.msra.mxu0 %v915
        %938 = vmatmul.bf16.gmra.mxu0 %v909
        %v939 = vpop.f32.mrf.mxu0
        %v940 = vadd.f32 0.0, %v939
        %v941 = vpop.f32.mrf.mxu0
        %942 = vdwg.mxu0
        %v943 = vadd.f32 %v902, %v927
        %v944 = vadd.f32 %v903, %v940
        %945 = vrot.lane.b32.xlu0 %v695, 127
        %v946 = vpop.permute.xlu0 %945
        %947 = vrot.lane.b32.xlu0 %v696, 127
        %v948 = vpop.permute.xlu0 %947
        %vm949 = vcmp.lt.s32.totalorder %v703, 127
        %v950 = vsel %vm949, %v946, %v948
        %v951 = vsel %vm949, %v948, %v946
        %v952 = vperm.slane %v509, 5
        %v953 = vperm.slane %v510, 5
        %v954 = vmul.f32 %v950, %v952
        %v955 = vmul.f32 %v951, %v953
        %s956 = scalar_lea.vmem %s7, 20
        %v957 = vld [vmem:[%s956] sm:$0xf]
        %v958 = vpack.c.bf16 %v954, %v954
        %v959 = vpack.c.bf16 %v955, %v955
        %v961 = vsel %vm729, %v957, 0
        %v964 = vsel %vm521, %v958, 0
        %v967 = vsel %vm521, %v959, 0
        %969 = vmatpush.bf16.msra.mxu0 0
        %970 = vmatpush.bf16.msra.mxu0 0
        %971 = vmatpush.bf16.msra.mxu0 0
        %972 = vmatpush.bf16.msra.mxu0 0
        %973 = vmatpush.bf16.msra.mxu0 0
        %974 = vmatpush.bf16.msra.mxu0 0
        %975 = vmatpush.bf16.msra.mxu0 0
        %976 = vmatpush.bf16.msra.mxu0 %v964
        %977 = vmatmul.bf16.gmra.mxu0 %v961
        %v978 = vpop.f32.mrf.mxu0
        %v979 = vadd.f32 0.0, %v978
        %v980 = vpop.f32.mrf.mxu0
        %981 = vdwg.mxu0
        %982 = vmatpush.bf16.msra.mxu0 0
        %983 = vmatpush.bf16.msra.mxu0 0
        %984 = vmatpush.bf16.msra.mxu0 0
        %985 = vmatpush.bf16.msra.mxu0 0
        %986 = vmatpush.bf16.msra.mxu0 0
        %987 = vmatpush.bf16.msra.mxu0 0
        %988 = vmatpush.bf16.msra.mxu0 0
        %989 = vmatpush.bf16.msra.mxu0 %v967
        %990 = vmatmul.bf16.gmra.mxu0 %v961
        %v991 = vpop.f32.mrf.mxu0
        %v992 = vadd.f32 0.0, %v991
        %v993 = vpop.f32.mrf.mxu0
        %994 = vdwg.mxu0
        %v995 = vadd.f32 %v943, %v979
        %v996 = vadd.f32 %v944, %v992
        %997 = vrot.lane.b32.xlu0 %v695, 113
        %v998 = vpop.permute.xlu0 %997
        %999 = vrot.lane.b32.xlu0 %v696, 113
        %v1000 = vpop.permute.xlu0 %999
        %vm1001 = vcmp.lt.s32.totalorder %v703, 113
        %v1002 = vsel %vm1001, %v998, %v1000
        %v1003 = vsel %vm1001, %v1000, %v998
        %v1004 = vperm.slane %v509, 6
        %v1005 = vperm.slane %v510, 6
        %v1006 = vmul.f32 %v1002, %v1004
        %v1007 = vmul.f32 %v1003, %v1005
        %s1008 = scalar_lea.vmem %s7, 24
        %v1009 = vld [vmem:[%s1008] sm:$0xf]
        %v1010 = vpack.c.bf16 %v1006, %v1006
        %v1011 = vpack.c.bf16 %v1007, %v1007
        %v1013 = vsel %vm729, %v1009, 0
        %v1016 = vsel %vm521, %v1010, 0
        %v1019 = vsel %vm521, %v1011, 0
        %1021 = vmatpush.bf16.msra.mxu0 0
        %1022 = vmatpush.bf16.msra.mxu0 0
        %1023 = vmatpush.bf16.msra.mxu0 0
        %1024 = vmatpush.bf16.msra.mxu0 0
        %1025 = vmatpush.bf16.msra.mxu0 0
        %1026 = vmatpush.bf16.msra.mxu0 0
        %1027 = vmatpush.bf16.msra.mxu0 0
        %1028 = vmatpush.bf16.msra.mxu0 %v1016
        %1029 = vmatmul.bf16.gmra.mxu0 %v1013
        %v1030 = vpop.f32.mrf.mxu0
        %v1031 = vadd.f32 0.0, %v1030
        %v1032 = vpop.f32.mrf.mxu0
        %1033 = vdwg.mxu0
        %1034 = vmatpush.bf16.msra.mxu0 0
        %1035 = vmatpush.bf16.msra.mxu0 0
        %1036 = vmatpush.bf16.msra.mxu0 0
        %1037 = vmatpush.bf16.msra.mxu0 0
        %1038 = vmatpush.bf16.msra.mxu0 0
        %1039 = vmatpush.bf16.msra.mxu0 0
        %1040 = vmatpush.bf16.msra.mxu0 0
        %1041 = vmatpush.bf16.msra.mxu0 %v1019
        %1042 = vmatmul.bf16.gmra.mxu0 %v1013
        %v1043 = vpop.f32.mrf.mxu0
        %v1044 = vadd.f32 0.0, %v1043
        %v1045 = vpop.f32.mrf.mxu0
        %1046 = vdwg.mxu0
        %v1047 = vadd.f32 %v995, %v1031
        %v1048 = vadd.f32 %v996, %v1044
        %1049 = vrot.lane.b32.xlu0 %v695, 112
        %v1050 = vpop.permute.xlu0 %1049
        %1051 = vrot.lane.b32.xlu0 %v696, 112
        %v1052 = vpop.permute.xlu0 %1051
        %vm1053 = vcmp.lt.s32.totalorder %v703, 112
        %v1054 = vsel %vm1053, %v1050, %v1052
        %v1055 = vsel %vm1053, %v1052, %v1050
        %v1056 = vperm.slane %v509, 7
        %v1057 = vperm.slane %v510, 7
        %v1058 = vmul.f32 %v1054, %v1056
        %v1059 = vmul.f32 %v1055, %v1057
        %s1060 = scalar_lea.vmem %s7, 28
        %v1061 = vld [vmem:[%s1060] sm:$0xf]
        %v1062 = vpack.c.bf16 %v1058, %v1058
        %v1063 = vpack.c.bf16 %v1059, %v1059
        %v1065 = vsel %vm729, %v1061, 0
        %v1068 = vsel %vm521, %v1062, 0
        %v1071 = vsel %vm521, %v1063, 0
        %1073 = vmatpush.bf16.msra.mxu0 0
        %1074 = vmatpush.bf16.msra.mxu0 0
        %1075 = vmatpush.bf16.msra.mxu0 0
        %1076 = vmatpush.bf16.msra.mxu0 0
        %1077 = vmatpush.bf16.msra.mxu0 0
        %1078 = vmatpush.bf16.msra.mxu0 0
        %1079 = vmatpush.bf16.msra.mxu0 0
        %1080 = vmatpush.bf16.msra.mxu0 %v1068
        %1081 = vmatmul.bf16.gmra.mxu0 %v1065
        %v1082 = vpop.f32.mrf.mxu0
        %v1083 = vadd.f32 0.0, %v1082
        %v1084 = vpop.f32.mrf.mxu0
        %1085 = vdwg.mxu0
        %1086 = vmatpush.bf16.msra.mxu0 0
        %1087 = vmatpush.bf16.msra.mxu0 0
        %1088 = vmatpush.bf16.msra.mxu0 0
        %1089 = vmatpush.bf16.msra.mxu0 0
        %1090 = vmatpush.bf16.msra.mxu0 0
        %1091 = vmatpush.bf16.msra.mxu0 0
        %1092 = vmatpush.bf16.msra.mxu0 0
        %1093 = vmatpush.bf16.msra.mxu0 %v1071
        %1094 = vmatmul.bf16.gmra.mxu0 %v1065
        %v1095 = vpop.f32.mrf.mxu0
        %v1096 = vadd.f32 0.0, %v1095
        %v1097 = vpop.f32.mrf.mxu0
        %1098 = vdwg.mxu0
        %v1099 = vadd.f32 %v1047, %v1083
        %v1100 = vadd.f32 %v1048, %v1096
        %1101 = vrot.lane.b32.xlu0 %v695, 111
        %v1102 = vpop.permute.xlu0 %1101
        %1103 = vrot.lane.b32.xlu0 %v696, 111
        %v1104 = vpop.permute.xlu0 %1103
        %vm1105 = vcmp.lt.s32.totalorder %v703, 111
        %v1106 = vsel %vm1105, %v1102, %v1104
        %v1107 = vsel %vm1105, %v1104, %v1102
        %v1108 = vperm.slane %v511, 0
        %v1109 = vperm.slane %v512, 0
        %v1110 = vmul.f32 %v1106, %v1108
        %v1111 = vmul.f32 %v1107, %v1109
        %s1112 = scalar_lea.vmem %s7, 32
        %v1113 = vld [vmem:[%s1112] sm:$0xf]
        %v1114 = vpack.c.bf16 %v1110, %v1110
        %v1115 = vpack.c.bf16 %v1111, %v1111
        %v1117 = vsel %vm729, %v1113, 0
        %v1120 = vsel %vm521, %v1114, 0
        %v1123 = vsel %vm521, %v1115, 0
        %1125 = vmatpush.bf16.msra.mxu0 0
        %1126 = vmatpush.bf16.msra.mxu0 0
        %1127 = vmatpush.bf16.msra.mxu0 0
        %1128 = vmatpush.bf16.msra.mxu0 0
        %1129 = vmatpush.bf16.msra.mxu0 0
        %1130 = vmatpush.bf16.msra.mxu0 0
        %1131 = vmatpush.bf16.msra.mxu0 0
        %1132 = vmatpush.bf16.msra.mxu0 %v1120
        %1133 = vmatmul.bf16.gmra.mxu0 %v1117
        %v1134 = vpop.f32.mrf.mxu0
        %v1135 = vadd.f32 0.0, %v1134
        %v1136 = vpop.f32.mrf.mxu0
        %1137 = vdwg.mxu0
        %1138 = vmatpush.bf16.msra.mxu0 0
        %1139 = vmatpush.bf16.msra.mxu0 0
        %1140 = vmatpush.bf16.msra.mxu0 0
        %1141 = vmatpush.bf16.msra.mxu0 0
        %1142 = vmatpush.bf16.msra.mxu0 0
        %1143 = vmatpush.bf16.msra.mxu0 0
        %1144 = vmatpush.bf16.msra.mxu0 0
        %1145 = vmatpush.bf16.msra.mxu0 %v1123
        %1146 = vmatmul.bf16.gmra.mxu0 %v1117
        %v1147 = vpop.f32.mrf.mxu0
        %v1148 = vadd.f32 0.0, %v1147
        %v1149 = vpop.f32.mrf.mxu0
        %1150 = vdwg.mxu0
        %v1151 = vadd.f32 %v1099, %v1135
        %v1152 = vadd.f32 %v1100, %v1148
        %1154 = vset.pattern.permute.xlu0 0
        %1155 = vperm.xlu0 %1154, %v697
        %v1156 = vpop.permute.xlu0 %1155
        %v1158 = vadd.f32 %v1151, %v1156
        %v1159 = vadd.f32 %v1152, %v1156
        %v1160 = vld [vmem:[%s3] sm:$0xff]
        %v1161 = vld [vmem:[%s506] sm:$0x1]
        %v1163 = vperm.slane %v1161, 0
        %v1165 = vmul.f32 %v1160, %v1163
        %vm1166 = vcmask 261120
        %v1167 = vsel %vm1166, %v1165, 0.0
        %1168 = vadd.xlane.f32.xlu0 %v1167
        %v1169 = vpop.xlane.xlu0 %1168
        %v1170 = vld [vmem:[%s4] sm:$0xff]
        %v1171 = vadd.f32 %v1169, %v1170
        %1173 = vset.pattern.permute.xlu0 0
        %1174 = vperm.xlu0 %1173, %v1171
        %v1175 = vpop.permute.xlu0 %1174
        %v1177 = vadd.f32 %v1158, %v1175
        %v1178 = vadd.f32 %v1159, %v1175
        %v1179 = vld [vmem:[%s9] sm:$0xff]
        %v1180 = vld [vmem:[%s10] sm:$0xff]
        %vm1181 = vcmask 1043456
        %v1182 = vsel %vm1181, %v1177, 0.0
        %v1183 = vsel %vm1181, %v1178, 0.0
        %v1184 = vadd.f32 %v1182, %v1183
        %1185 = vadd.xlane.f32.xlu0 %v1184
        %v1186 = vpop.xlane.xlu0 %1185
        %v1187 = vrot.slane %v1186, 4
        %v1188 = vadd.f32 %v1186, %v1187
        %v1189 = vrot.slane %v1188, 2
        %v1190 = vadd.f32 %v1188, %v1189
        %v1191 = vrot.slane %v1190, 1
        %v1192 = vadd.f32 %v1190, %v1191
        %s1193 = vtos %v1192
        %v1194 = vstv %s1193
        %v1195 = vmul.f32 %v1194, 0.0009765625
        %v1196 = vmul.f32 %v1177, %v1177
        %v1197 = vmul.f32 %v1178, %v1178
        %v1198 = vsel %vm1181, %v1196, 0.0
        %v1199 = vsel %vm1181, %v1197, 0.0
        %v1200 = vadd.f32 %v1198, %v1199
        %1201 = vadd.xlane.f32.xlu0 %v1200
        %v1202 = vpop.xlane.xlu0 %1201
        %v1203 = vrot.slane %v1202, 4
        %v1204 = vadd.f32 %v1202, %v1203
        %v1205 = vrot.slane %v1204, 2
        %v1206 = vadd.f32 %v1204, %v1205
        %v1207 = vrot.slane %v1206, 1
        %v1208 = vadd.f32 %v1206, %v1207
        %s1209 = vtos %v1208
        %v1210 = vstv %s1209
        %v1211 = vmul.f32 %v1210, 0.0009765625
        %v1212 = vmul.f32 %v1195, %v1195
        %v1213 = vsub.f32 %v1211, %v1212
        %v1214 = vsub.f32 %v1177, %v1195
        %v1215 = vsub.f32 %v1178, %v1195
        %v1216 = vadd.f32 %v1213, 1e-05
        %v1217 = vrsqrt.pop %v1216
        %v1218 = vmul.f32 %v1217, %v1216
        %v1219 = vmul.f32 %v1218, %v1217
        %v1220 = vmul.f32 0.5, %v1219
        %v1221 = vsub.f32 1.5, %v1220
        %v1222 = vmul.f32 %v1217, %v1221
        %vm1223 = vweird.f32 %v1216
        %vm1224 = vweird.f32 %v1217
        %vm1225 = vmor %vm1223, %vm1224
        %v1226 = vsel %vm1225, %v1217, %v1222
        %v1227 = vmul.f32 %v1214, %v1226
        %v1228 = vmul.f32 %v1215, %v1226
        %v1231 = vrot.slane %v1177, 4
        %v1232 = vrot.slane %v1178, 4
        %v1235 = vsel %vm1181, %v1231, 0.0
        %v1236 = vsel %vm1181, %v1232, 0.0
        %v1237 = vadd.f32 %v1235, %v1236
        %1238 = vadd.xlane.f32.xlu0 %v1237
        %v1239 = vpop.xlane.xlu0 %1238
        %v1240 = vrot.slane %v1239, 4
        %v1241 = vadd.f32 %v1239, %v1240
        %v1242 = vrot.slane %v1241, 2
        %v1243 = vadd.f32 %v1241, %v1242
        %v1244 = vrot.slane %v1243, 1
        %v1245 = vadd.f32 %v1243, %v1244
        %s1246 = vtos %v1245
        %v1247 = vstv %s1246
        %v1248 = vmul.f32 %v1247, 0.0009765625
        %v1251 = vrot.slane %v1196, 4
        %v1252 = vrot.slane %v1197, 4
        %v1255 = vsel %vm1181, %v1251, 0.0
        %v1256 = vsel %vm1181, %v1252, 0.0
        %v1257 = vadd.f32 %v1255, %v1256
        %1258 = vadd.xlane.f32.xlu0 %v1257
        %v1259 = vpop.xlane.xlu0 %1258
        %v1260 = vrot.slane %v1259, 4
        %v1261 = vadd.f32 %v1259, %v1260
        %v1262 = vrot.slane %v1261, 2
        %v1263 = vadd.f32 %v1261, %v1262
        %v1264 = vrot.slane %v1263, 1
        %v1265 = vadd.f32 %v1263, %v1264
        %s1266 = vtos %v1265
        %v1267 = vstv %s1266
        %v1268 = vmul.f32 %v1267, 0.0009765625
        %v1269 = vmul.f32 %v1248, %v1248
        %v1270 = vsub.f32 %v1268, %v1269
        %v1271 = vsub.f32 %v1177, %v1248
        %v1272 = vsub.f32 %v1178, %v1248
        %v1273 = vadd.f32 %v1270, 1e-05
        %v1274 = vrsqrt.pop %v1273
        %v1275 = vmul.f32 %v1274, %v1273
        %v1276 = vmul.f32 %v1275, %v1274
        %v1277 = vmul.f32 0.5, %v1276
        %v1278 = vsub.f32 1.5, %v1277
        %v1279 = vmul.f32 %v1274, %v1278
        %vm1280 = vweird.f32 %v1273
        %vm1281 = vweird.f32 %v1274
        %vm1282 = vmor %vm1280, %vm1281
        %v1283 = vsel %vm1282, %v1274, %v1279
        %v1284 = vmul.f32 %v1271, %v1283
        %v1285 = vmul.f32 %v1272, %v1283
        %v1286 = vsel %vm1181, %v1227, %v1284
        %v1287 = vsel %vm1181, %v1228, %v1285
        %1289 = vset.pattern.permute.xlu0 0
        %1290 = vperm.xlu0 %1289, %v1179
        %v1291 = vpop.permute.xlu0 %1290
        %v1293 = vmul.f32 %v1286, %v1291
        %v1294 = vmul.f32 %v1287, %v1291
        %1296 = vset.pattern.permute.xlu0 0
        %1297 = vperm.xlu0 %1296, %v1180
        %v1298 = vpop.permute.xlu0 %1297
        %v1300 = vadd.f32 %v1293, %v1298
        %v1301 = vadd.f32 %v1294, %v1298
        %v1302 = vxor.u32 %v1300, 2147483648
        %v1303 = vxor.u32 %v1301, 2147483648
        %v1304 = vmul.f32 %v1302, 1.442695
        %v1305 = vpow.pop %v1304
        %v1306 = vmul.f32 %v1303, 1.442695
        %v1307 = vpow.pop %v1306
        %v1308 = vadd.f32 %v1305, 1.0
        %v1309 = vadd.f32 %v1307, 1.0
        %v1310 = vrcp.pop %v1308
        %v1311 = vmul.f32 %v1308, %v1310
        %v1312 = vsub.f32 1.0, %v1311
        %v1313 = vmul.f32 %v1310, %v1312
        %v1314 = vadd.f32 %v1310, %v1313
        %vm1315 = vweird.f32 %v1308
        %vm1316 = vweird.f32 %v1310
        %vm1317 = vmor %vm1315, %vm1316
        %v1318 = vsel %vm1317, %v1310, %v1314
        %v1319 = vand.u32 2147483647, %v1308
        %vm1320 = vcmp.eq.f32.partialorder %v1319, 8.507059e+37
        %v1321 = vand.u32 %v1308, 2147483648
        %v1322 = vor.u32 1.1754944e-38, %v1321
        %v1323 = vsel %vm1320, %v1322, %v1318
        %v1324 = vmul.f32 1.0, %v1323
        %v1325 = vrcp.pop %v1309
        %v1326 = vmul.f32 %v1309, %v1325
        %v1327 = vsub.f32 1.0, %v1326
        %v1328 = vmul.f32 %v1325, %v1327
        %v1329 = vadd.f32 %v1325, %v1328
        %vm1330 = vweird.f32 %v1309
        %vm1331 = vweird.f32 %v1325
        %vm1332 = vmor %vm1330, %vm1331
        %v1333 = vsel %vm1332, %v1325, %v1329
        %v1334 = vand.u32 2147483647, %v1309
        %vm1335 = vcmp.eq.f32.partialorder %v1334, 8.507059e+37
        %v1336 = vand.u32 %v1309, 2147483648
        %v1337 = vor.u32 1.1754944e-38, %v1336
        %v1338 = vsel %vm1335, %v1337, %v1333
        %v1339 = vmul.f32 1.0, %v1338
        %v1340 = vmul.f32 %v1300, %v1324
        %v1341 = vmul.f32 %v1301, %v1339
        %v1342 = vld [vmem:[%s12] sm:$0xff]
        %1343 = vrot.lane.b32.xlu0 %v1340, 17
        %v1344 = vpop.permute.xlu0 %1343
        %1345 = vrot.lane.b32.xlu0 %v1341, 17
        %v1346 = vpop.permute.xlu0 %1345
        %v1347 = vsel %vm704, %v1344, %v1346
        %v1348 = vsel %vm704, %v1346, %v1344
        %v1349 = vmul.f32 %v1348, %v707
        %v1350 = vmul.f32 %v1347, %v708
        %v1351 = vld [vmem:[%s11] sm:$0xf]
        %v1352 = vpack.c.bf16 %v1349, %v1349
        %v1353 = vpack.c.bf16 %v1350, %v1350
        %1354 = vrot.lane.b32.xlu0 %v1340, 16
        %v1355 = vpop.permute.xlu0 %1354
        %1356 = vrot.lane.b32.xlu0 %v1341, 16
        %v1357 = vpop.permute.xlu0 %1356
        %v1358 = vsel %vm718, %v1355, %v1357
        %v1359 = vsel %vm718, %v1357, %v1355
        %v1360 = vmul.f32 %v1359, %v721
        %v1361 = vmul.f32 %v1358, %v722
        %s1362 = scalar_lea.vmem %s11, 4
        %v1363 = vld [vmem:[%s1362] sm:$0xf]
        %v1364 = vpack.c.bf16 %v1360, %v1360
        %v1365 = vpack.c.bf16 %v1361, %v1361
        %vm1366 = vcmask 64512
        %v1368 = vsel %vm1366, %v1363, 0
        %v1371 = vsel %vm1181, %v1364, 0
        %v1374 = vsel %vm1181, %v1365, 0
        %1376 = vmatpush.bf16.msra.mxu0 0
        %1377 = vmatpush.bf16.msra.mxu0 0
        %1378 = vmatpush.bf16.msra.mxu0 0
        %1379 = vmatpush.bf16.msra.mxu0 0
        %1380 = vmatpush.bf16.msra.mxu0 0
        %1381 = vmatpush.bf16.msra.mxu0 0
        %1382 = vmatpush.bf16.msra.mxu0 0
        %1383 = vmatpush.bf16.msra.mxu0 %v1371
        %1384 = vmatmul.bf16.gmra.mxu0 %v1368
        %v1385 = vpop.f32.mrf.mxu0
        %v1386 = vadd.f32 0.0, %v1385
        %v1387 = vpop.f32.mrf.mxu0
        %1388 = vdwg.mxu0
        %1389 = vmatpush.bf16.msra.mxu0 0
        %1390 = vmatpush.bf16.msra.mxu0 0
        %1391 = vmatpush.bf16.msra.mxu0 0
        %1392 = vmatpush.bf16.msra.mxu0 0
        %1393 = vmatpush.bf16.msra.mxu0 0
        %1394 = vmatpush.bf16.msra.mxu0 0
        %1395 = vmatpush.bf16.msra.mxu0 0
        %1396 = vmatpush.bf16.msra.mxu0 %v1374
        %1397 = vmatmul.bf16.gmra.mxu0 %v1368
        %v1398 = vpop.f32.mrf.mxu0
        %v1399 = vadd.f32 0.0, %v1398
        %v1400 = vpop.f32.mrf.mxu0
        %1401 = vdwg.mxu0
        %v1403 = vsel %vm1366, %v1351, 0
        %v1406 = vsel %vm1181, %v1352, 0
        %v1409 = vsel %vm1181, %v1353, 0
        %1411 = vmatpush.bf16.msra.mxu0 0
        %1412 = vmatpush.bf16.msra.mxu0 0
        %1413 = vmatpush.bf16.msra.mxu0 0
        %1414 = vmatpush.bf16.msra.mxu0 0
        %1415 = vmatpush.bf16.msra.mxu0 0
        %1416 = vmatpush.bf16.msra.mxu0 0
        %1417 = vmatpush.bf16.msra.mxu0 0
        %1418 = vmatpush.bf16.msra.mxu0 %v1406
        %1419 = vmatmul.bf16.gmra.mxu0 %v1403
        %v1420 = vpop.f32.mrf.mxu0
        %v1421 = vadd.f32 %v1386, %v1420
        %v1422 = vpop.f32.mrf.mxu0
        %1423 = vdwg.mxu0
        %1424 = vmatpush.bf16.msra.mxu0 0
        %1425 = vmatpush.bf16.msra.mxu0 0
        %1426 = vmatpush.bf16.msra.mxu0 0
        %1427 = vmatpush.bf16.msra.mxu0 0
        %1428 = vmatpush.bf16.msra.mxu0 0
        %1429 = vmatpush.bf16.msra.mxu0 0
        %1430 = vmatpush.bf16.msra.mxu0 0
        %1431 = vmatpush.bf16.msra.mxu0 %v1409
        %1432 = vmatmul.bf16.gmra.mxu0 %v1403
        %v1433 = vpop.f32.mrf.mxu0
        %v1434 = vadd.f32 %v1399, %v1433
        %v1435 = vpop.f32.mrf.mxu0
        %1436 = vdwg.mxu0
        %1437 = vrot.lane.b32.xlu0 %v1340, 15
        %v1438 = vpop.permute.xlu0 %1437
        %1439 = vrot.lane.b32.xlu0 %v1341, 15
        %v1440 = vpop.permute.xlu0 %1439
        %v1441 = vsel %vm804, %v1438, %v1440
        %v1442 = vsel %vm804, %v1440, %v1438
        %v1443 = vmul.f32 %v1442, %v807
        %v1444 = vmul.f32 %v1441, %v808
        %s1445 = scalar_lea.vmem %s11, 8
        %v1446 = vld [vmem:[%s1445] sm:$0xf]
        %v1447 = vpack.c.bf16 %v1443, %v1443
        %v1448 = vpack.c.bf16 %v1444, %v1444
        %v1450 = vsel %vm1366, %v1446, 0
        %v1453 = vsel %vm1181, %v1447, 0
        %v1456 = vsel %vm1181, %v1448, 0
        %1458 = vmatpush.bf16.msra.mxu0 0
        %1459 = vmatpush.bf16.msra.mxu0 0
        %1460 = vmatpush.bf16.msra.mxu0 0
        %1461 = vmatpush.bf16.msra.mxu0 0
        %1462 = vmatpush.bf16.msra.mxu0 0
        %1463 = vmatpush.bf16.msra.mxu0 0
        %1464 = vmatpush.bf16.msra.mxu0 0
        %1465 = vmatpush.bf16.msra.mxu0 %v1453
        %1466 = vmatmul.bf16.gmra.mxu0 %v1450
        %v1467 = vpop.f32.mrf.mxu0
        %v1468 = vadd.f32 0.0, %v1467
        %v1469 = vpop.f32.mrf.mxu0
        %1470 = vdwg.mxu0
        %1471 = vmatpush.bf16.msra.mxu0 0
        %1472 = vmatpush.bf16.msra.mxu0 0
        %1473 = vmatpush.bf16.msra.mxu0 0
        %1474 = vmatpush.bf16.msra.mxu0 0
        %1475 = vmatpush.bf16.msra.mxu0 0
        %1476 = vmatpush.bf16.msra.mxu0 0
        %1477 = vmatpush.bf16.msra.mxu0 0
        %1478 = vmatpush.bf16.msra.mxu0 %v1456
        %1479 = vmatmul.bf16.gmra.mxu0 %v1450
        %v1480 = vpop.f32.mrf.mxu0
        %v1481 = vadd.f32 0.0, %v1480
        %v1482 = vpop.f32.mrf.mxu0
        %1483 = vdwg.mxu0
        %v1484 = vadd.f32 %v1421, %v1468
        %v1485 = vadd.f32 %v1434, %v1481
        %1486 = vrot.lane.b32.xlu0 %v1340, 1
        %v1487 = vpop.permute.xlu0 %1486
        %1488 = vrot.lane.b32.xlu0 %v1341, 1
        %v1489 = vpop.permute.xlu0 %1488
        %v1490 = vsel %vm856, %v1487, %v1489
        %v1491 = vsel %vm856, %v1489, %v1487
        %v1492 = vmul.f32 %v1491, %v859
        %v1493 = vmul.f32 %v1490, %v860
        %s1494 = scalar_lea.vmem %s11, 12
        %v1495 = vld [vmem:[%s1494] sm:$0xf]
        %v1496 = vpack.c.bf16 %v1492, %v1492
        %v1497 = vpack.c.bf16 %v1493, %v1493
        %v1499 = vsel %vm1366, %v1495, 0
        %v1502 = vsel %vm1181, %v1496, 0
        %v1505 = vsel %vm1181, %v1497, 0
        %1507 = vmatpush.bf16.msra.mxu0 0
        %1508 = vmatpush.bf16.msra.mxu0 0
        %1509 = vmatpush.bf16.msra.mxu0 0
        %1510 = vmatpush.bf16.msra.mxu0 0
        %1511 = vmatpush.bf16.msra.mxu0 0
        %1512 = vmatpush.bf16.msra.mxu0 0
        %1513 = vmatpush.bf16.msra.mxu0 0
        %1514 = vmatpush.bf16.msra.mxu0 %v1502
        %1515 = vmatmul.bf16.gmra.mxu0 %v1499
        %v1516 = vpop.f32.mrf.mxu0
        %v1517 = vadd.f32 0.0, %v1516
        %v1518 = vpop.f32.mrf.mxu0
        %1519 = vdwg.mxu0
        %1520 = vmatpush.bf16.msra.mxu0 0
        %1521 = vmatpush.bf16.msra.mxu0 0
        %1522 = vmatpush.bf16.msra.mxu0 0
        %1523 = vmatpush.bf16.msra.mxu0 0
        %1524 = vmatpush.bf16.msra.mxu0 0
        %1525 = vmatpush.bf16.msra.mxu0 0
        %1526 = vmatpush.bf16.msra.mxu0 0
        %1527 = vmatpush.bf16.msra.mxu0 %v1505
        %1528 = vmatmul.bf16.gmra.mxu0 %v1499
        %v1529 = vpop.f32.mrf.mxu0
        %v1530 = vadd.f32 0.0, %v1529
        %v1531 = vpop.f32.mrf.mxu0
        %1532 = vdwg.mxu0
        %v1533 = vadd.f32 %v1484, %v1517
        %v1534 = vadd.f32 %v1485, %v1530
        %s1535 = scalar_lea.vmem %s11, 16
        %v1536 = vld [vmem:[%s1535] sm:$0xf]
        %v1537 = vpack.c.bf16 %v1340, %v1340
        %v1538 = vpack.c.bf16 %v1341, %v1341
        %v1540 = vsel %vm1366, %v1536, 0
        %v1543 = vsel %vm1181, %v1537, 0
        %v1546 = vsel %vm1181, %v1538, 0
        %1548 = vmatpush.bf16.msra.mxu0 0
        %1549 = vmatpush.bf16.msra.mxu0 0
        %1550 = vmatpush.bf16.msra.mxu0 0
        %1551 = vmatpush.bf16.msra.mxu0 0
        %1552 = vmatpush.bf16.msra.mxu0 0
        %1553 = vmatpush.bf16.msra.mxu0 0
        %1554 = vmatpush.bf16.msra.mxu0 0
        %1555 = vmatpush.bf16.msra.mxu0 %v1543
        %1556 = vmatmul.bf16.gmra.mxu0 %v1540
        %v1557 = vpop.f32.mrf.mxu0
        %v1558 = vadd.f32 0.0, %v1557
        %v1559 = vpop.f32.mrf.mxu0
        %1560 = vdwg.mxu0
        %1561 = vmatpush.bf16.msra.mxu0 0
        %1562 = vmatpush.bf16.msra.mxu0 0
        %1563 = vmatpush.bf16.msra.mxu0 0
        %1564 = vmatpush.bf16.msra.mxu0 0
        %1565 = vmatpush.bf16.msra.mxu0 0
        %1566 = vmatpush.bf16.msra.mxu0 0
        %1567 = vmatpush.bf16.msra.mxu0 0
        %1568 = vmatpush.bf16.msra.mxu0 %v1546
        %1569 = vmatmul.bf16.gmra.mxu0 %v1540
        %v1570 = vpop.f32.mrf.mxu0
        %v1571 = vadd.f32 0.0, %v1570
        %v1572 = vpop.f32.mrf.mxu0
        %1573 = vdwg.mxu0
        %v1574 = vadd.f32 %v1533, %v1558
        %v1575 = vadd.f32 %v1534, %v1571
        %1576 = vrot.lane.b32.xlu0 %v1340, 127
        %v1577 = vpop.permute.xlu0 %1576
        %1578 = vrot.lane.b32.xlu0 %v1341, 127
        %v1579 = vpop.permute.xlu0 %1578
        %v1580 = vsel %vm949, %v1577, %v1579
        %v1581 = vsel %vm949, %v1579, %v1577
        %v1582 = vmul.f32 %v1580, %v952
        %v1583 = vmul.f32 %v1581, %v953
        %s1584 = scalar_lea.vmem %s11, 20
        %v1585 = vld [vmem:[%s1584] sm:$0xf]
        %v1586 = vpack.c.bf16 %v1582, %v1582
        %v1587 = vpack.c.bf16 %v1583, %v1583
        %v1589 = vsel %vm1366, %v1585, 0
        %v1592 = vsel %vm1181, %v1586, 0
        %v1595 = vsel %vm1181, %v1587, 0
        %1597 = vmatpush.bf16.msra.mxu0 0
        %1598 = vmatpush.bf16.msra.mxu0 0
        %1599 = vmatpush.bf16.msra.mxu0 0
        %1600 = vmatpush.bf16.msra.mxu0 0
        %1601 = vmatpush.bf16.msra.mxu0 0
        %1602 = vmatpush.bf16.msra.mxu0 0
        %1603 = vmatpush.bf16.msra.mxu0 0
        %1604 = vmatpush.bf16.msra.mxu0 %v1592
        %1605 = vmatmul.bf16.gmra.mxu0 %v1589
        %v1606 = vpop.f32.mrf.mxu0
        %v1607 = vadd.f32 0.0, %v1606
        %v1608 = vpop.f32.mrf.mxu0
        %1609 = vdwg.mxu0
        %1610 = vmatpush.bf16.msra.mxu0 0
        %1611 = vmatpush.bf16.msra.mxu0 0
        %1612 = vmatpush.bf16.msra.mxu0 0
        %1613 = vmatpush.bf16.msra.mxu0 0
        %1614 = vmatpush.bf16.msra.mxu0 0
        %1615 = vmatpush.bf16.msra.mxu0 0
        %1616 = vmatpush.bf16.msra.mxu0 0
        %1617 = vmatpush.bf16.msra.mxu0 %v1595
        %1618 = vmatmul.bf16.gmra.mxu0 %v1589
        %v1619 = vpop.f32.mrf.mxu0
        %v1620 = vadd.f32 0.0, %v1619
        %v1621 = vpop.f32.mrf.mxu0
        %1622 = vdwg.mxu0
        %v1623 = vadd.f32 %v1574, %v1607
        %v1624 = vadd.f32 %v1575, %v1620
        %1625 = vrot.lane.b32.xlu0 %v1340, 113
        %v1626 = vpop.permute.xlu0 %1625
        %1627 = vrot.lane.b32.xlu0 %v1341, 113
        %v1628 = vpop.permute.xlu0 %1627
        %v1629 = vsel %vm1001, %v1626, %v1628
        %v1630 = vsel %vm1001, %v1628, %v1626
        %v1631 = vmul.f32 %v1629, %v1004
        %v1632 = vmul.f32 %v1630, %v1005
        %s1633 = scalar_lea.vmem %s11, 24
        %v1634 = vld [vmem:[%s1633] sm:$0xf]
        %v1635 = vpack.c.bf16 %v1631, %v1631
        %v1636 = vpack.c.bf16 %v1632, %v1632
        %v1638 = vsel %vm1366, %v1634, 0
        %v1641 = vsel %vm1181, %v1635, 0
        %v1644 = vsel %vm1181, %v1636, 0
        %1646 = vmatpush.bf16.msra.mxu0 0
        %1647 = vmatpush.bf16.msra.mxu0 0
        %1648 = vmatpush.bf16.msra.mxu0 0
        %1649 = vmatpush.bf16.msra.mxu0 0
        %1650 = vmatpush.bf16.msra.mxu0 0
        %1651 = vmatpush.bf16.msra.mxu0 0
        %1652 = vmatpush.bf16.msra.mxu0 0
        %1653 = vmatpush.bf16.msra.mxu0 %v1641
        %1654 = vmatmul.bf16.gmra.mxu0 %v1638
        %v1655 = vpop.f32.mrf.mxu0
        %v1656 = vadd.f32 0.0, %v1655
        %v1657 = vpop.f32.mrf.mxu0
        %1658 = vdwg.mxu0
        %1659 = vmatpush.bf16.msra.mxu0 0
        %1660 = vmatpush.bf16.msra.mxu0 0
        %1661 = vmatpush.bf16.msra.mxu0 0
        %1662 = vmatpush.bf16.msra.mxu0 0
        %1663 = vmatpush.bf16.msra.mxu0 0
        %1664 = vmatpush.bf16.msra.mxu0 0
        %1665 = vmatpush.bf16.msra.mxu0 0
        %1666 = vmatpush.bf16.msra.mxu0 %v1644
        %1667 = vmatmul.bf16.gmra.mxu0 %v1638
        %v1668 = vpop.f32.mrf.mxu0
        %v1669 = vadd.f32 0.0, %v1668
        %v1670 = vpop.f32.mrf.mxu0
        %1671 = vdwg.mxu0
        %v1672 = vadd.f32 %v1623, %v1656
        %v1673 = vadd.f32 %v1624, %v1669
        %1674 = vrot.lane.b32.xlu0 %v1340, 112
        %v1675 = vpop.permute.xlu0 %1674
        %1676 = vrot.lane.b32.xlu0 %v1341, 112
        %v1677 = vpop.permute.xlu0 %1676
        %v1678 = vsel %vm1053, %v1675, %v1677
        %v1679 = vsel %vm1053, %v1677, %v1675
        %v1680 = vmul.f32 %v1678, %v1056
        %v1681 = vmul.f32 %v1679, %v1057
        %s1682 = scalar_lea.vmem %s11, 28
        %v1683 = vld [vmem:[%s1682] sm:$0xf]
        %v1684 = vpack.c.bf16 %v1680, %v1680
        %v1685 = vpack.c.bf16 %v1681, %v1681
        %v1687 = vsel %vm1366, %v1683, 0
        %v1690 = vsel %vm1181, %v1684, 0
        %v1693 = vsel %vm1181, %v1685, 0
        %1695 = vmatpush.bf16.msra.mxu0 0
        %1696 = vmatpush.bf16.msra.mxu0 0
        %1697 = vmatpush.bf16.msra.mxu0 0
        %1698 = vmatpush.bf16.msra.mxu0 0
        %1699 = vmatpush.bf16.msra.mxu0 0
        %1700 = vmatpush.bf16.msra.mxu0 0
        %1701 = vmatpush.bf16.msra.mxu0 0
        %1702 = vmatpush.bf16.msra.mxu0 %v1690
        %1703 = vmatmul.bf16.gmra.mxu0 %v1687
        %v1704 = vpop.f32.mrf.mxu0
        %v1705 = vadd.f32 0.0, %v1704
        %v1706 = vpop.f32.mrf.mxu0
        %1707 = vdwg.mxu0
        %1708 = vmatpush.bf16.msra.mxu0 0
        %1709 = vmatpush.bf16.msra.mxu0 0
        %1710 = vmatpush.bf16.msra.mxu0 0
        %1711 = vmatpush.bf16.msra.mxu0 0
        %1712 = vmatpush.bf16.msra.mxu0 0
        %1713 = vmatpush.bf16.msra.mxu0 0
        %1714 = vmatpush.bf16.msra.mxu0 0
        %1715 = vmatpush.bf16.msra.mxu0 %v1693
        %1716 = vmatmul.bf16.gmra.mxu0 %v1687
        %v1717 = vpop.f32.mrf.mxu0
        %v1718 = vadd.f32 0.0, %v1717
        %v1719 = vpop.f32.mrf.mxu0
        %1720 = vdwg.mxu0
        %v1721 = vadd.f32 %v1672, %v1705
        %v1722 = vadd.f32 %v1673, %v1718
        %1723 = vrot.lane.b32.xlu0 %v1340, 111
        %v1724 = vpop.permute.xlu0 %1723
        %1725 = vrot.lane.b32.xlu0 %v1341, 111
        %v1726 = vpop.permute.xlu0 %1725
        %v1727 = vsel %vm1105, %v1724, %v1726
        %v1728 = vsel %vm1105, %v1726, %v1724
        %v1729 = vmul.f32 %v1727, %v1108
        %v1730 = vmul.f32 %v1728, %v1109
        %s1731 = scalar_lea.vmem %s11, 32
        %v1732 = vld [vmem:[%s1731] sm:$0xf]
        %v1733 = vpack.c.bf16 %v1729, %v1729
        %v1734 = vpack.c.bf16 %v1730, %v1730
        %v1736 = vsel %vm1366, %v1732, 0
        %v1739 = vsel %vm1181, %v1733, 0
        %v1742 = vsel %vm1181, %v1734, 0
        %1744 = vmatpush.bf16.msra.mxu0 0
        %1745 = vmatpush.bf16.msra.mxu0 0
        %1746 = vmatpush.bf16.msra.mxu0 0
        %1747 = vmatpush.bf16.msra.mxu0 0
        %1748 = vmatpush.bf16.msra.mxu0 0
        %1749 = vmatpush.bf16.msra.mxu0 0
        %1750 = vmatpush.bf16.msra.mxu0 0
        %1751 = vmatpush.bf16.msra.mxu0 %v1739
        %1752 = vmatmul.bf16.gmra.mxu0 %v1736
        %v1753 = vpop.f32.mrf.mxu0
        %v1754 = vadd.f32 0.0, %v1753
        %v1755 = vpop.f32.mrf.mxu0
        %1756 = vdwg.mxu0
        %1757 = vmatpush.bf16.msra.mxu0 0
        %1758 = vmatpush.bf16.msra.mxu0 0
        %1759 = vmatpush.bf16.msra.mxu0 0
        %1760 = vmatpush.bf16.msra.mxu0 0
        %1761 = vmatpush.bf16.msra.mxu0 0
        %1762 = vmatpush.bf16.msra.mxu0 0
        %1763 = vmatpush.bf16.msra.mxu0 0
        %1764 = vmatpush.bf16.msra.mxu0 %v1742
        %1765 = vmatmul.bf16.gmra.mxu0 %v1736
        %v1766 = vpop.f32.mrf.mxu0
        %v1767 = vadd.f32 0.0, %v1766
        %v1768 = vpop.f32.mrf.mxu0
        %1769 = vdwg.mxu0
        %v1770 = vadd.f32 %v1721, %v1754
        %v1771 = vadd.f32 %v1722, %v1767
        %1773 = vset.pattern.permute.xlu0 0
        %1774 = vperm.xlu0 %1773, %v1342
        %v1775 = vpop.permute.xlu0 %1774
        %v1777 = vadd.f32 %v1770, %v1775
        %v1778 = vadd.f32 %v1771, %v1775
        %v1779 = vld [vmem:[%s13] sm:$0xf]
        %1780 = vst [vmem:[#allocation1] ss:$2 sm:$0xff] %v508
        %v1781 = vld.sshfl [vmem:[#allocation1] sm:$0xff pattern:$0x75316420]
        %v1782 = vld.sshfl [vmem:[#allocation1 + $0x8] sm:$0xff pattern:$0x75316420]
        %v1785 = vpack.c.bf16 %v1781, %v1781
        %v1786 = vpack.c.bf16 %v1782, %v1782
        %v1788 = vsel %vm729, %v1779, 0
        %v1791 = vsel %vm521, %v1785, 0
        %v1794 = vsel %vm521, %v1786, 0
        %1796 = vmatpush.bf16.msra.mxu0 0
        %1797 = vmatpush.bf16.msra.mxu0 0
        %1798 = vmatpush.bf16.msra.mxu0 0
        %1799 = vmatpush.bf16.msra.mxu0 0
        %1800 = vmatpush.bf16.msra.mxu0 0
        %1801 = vmatpush.bf16.msra.mxu0 0
        %1802 = vmatpush.bf16.msra.mxu0 0
        %1803 = vmatpush.bf16.msra.mxu0 %v1791
        %1804 = vmatmul.bf16.gmra.mxu0 %v1788
        %v1805 = vpop.f32.mrf.mxu0
        %v1806 = vadd.f32 0.0, %v1805
        %v1807 = vpop.f32.mrf.mxu0
        %1808 = vdwg.mxu0
        %1809 = vmatpush.bf16.msra.mxu0 0
        %1810 = vmatpush.bf16.msra.mxu0 0
        %1811 = vmatpush.bf16.msra.mxu0 0
        %1812 = vmatpush.bf16.msra.mxu0 0
        %1813 = vmatpush.bf16.msra.mxu0 0
        %1814 = vmatpush.bf16.msra.mxu0 0
        %1815 = vmatpush.bf16.msra.mxu0 0
        %1816 = vmatpush.bf16.msra.mxu0 %v1794
        %1817 = vmatmul.bf16.gmra.mxu0 %v1788
        %v1818 = vpop.f32.mrf.mxu0
        %v1819 = vadd.f32 0.0, %v1818
        %v1820 = vpop.f32.mrf.mxu0
        %1821 = vdwg.mxu0
        %v1822 = vadd.f32 %v1777, %v1806
        %v1823 = vadd.f32 %v1778, %v1819
        %v1824 = vld [vmem:[%s14] sm:$0xff]
        %1826 = vset.pattern.permute.xlu0 0
        %1827 = vperm.xlu0 %1826, %v1824
        %v1828 = vpop.permute.xlu0 %1827
        %v1830 = vadd.f32 %v1822, %v1828
        %v1831 = vadd.f32 %v1823, %v1828
        %1832 = vst [vmem:[%s498] sm:$0xff] %v1830
        %1833 = vst [vmem:[%s498 + $0x8] sm:$0xff] %v1831
        %s1834 = sand.u32 %s362, 1
        %s1835 = scalar_lea.sflag [#allocation3], %s1834
        %s1836 = sand.u32 %s362, 1
        %s1837 = smul.addr %s1836, 16
        %s1838 = scalar_lea.vmem [#allocation2], %s1837
        // Predicated region
        $region81: #{tpu_custom_call.1} parent=79 // pred_check
          %p1839 = pneg %p372
        $region82: #{tpu_custom_call.1} parent=79 // pred_check_branch
          %1841 = sbr.rel (%p1839) target = $region84
        $region83: #{tpu_custom_call.1} parent=79 // pred_region
          %1843 = vsyncadd %s1835, 0
          %s1844 = smul.addr %s29, 2
          %s1845 = smul.addr %s1844, 8
          %s1846 = scalar_lea.hbm %s15, %s1845
          %s1848 = sshll.u32 %s1838, 4
          %s1849 = int_to_ptr.vmem [resolvable:$true] %s1848
          %s1850 = sshll.u32 %s1846, 4
          %s1851 = int_to_ptr.hbm [resolvable:$true] %s1850
          %1853 = dma.vmem_to_hbm [thread:$0]  %s1849, 256, %s1851, %s1835
        $region84: #{tpu_custom_call.1} parent=79 // pred_fallthru
          _
      $region80: #{tpu_custom_call.1} parent=5 // pred_fallthru
        _
      %p1854 = scmp.le.s32.totalorder 2, %s24
      // Predicated region
      $region85: #{tpu_custom_call.1} parent=5 // pred_check
        %p1855 = pneg %p1854
      $region86: #{tpu_custom_call.1} parent=5 // pred_check_branch
        %1857 = sbr.rel (%p1855) target = $region88
      $region87: #{tpu_custom_call.1} parent=5 // pred_region
        %s1858 = ssub.s32 %s24, 2
        // Predicated region
        $region89: #{tpu_custom_call.1} parent=87 // pred_check
          %p1859 = pneg %p378
        $region90: #{tpu_custom_call.1} parent=87 // pred_check_branch
          %1861 = sbr.rel (%p1859) target = $region92
        $region91: #{tpu_custom_call.1} parent=87 // pred_region
          %s1862 = sand.u32 %s363, 1
          %s1863 = scalar_lea.sflag [#allocation3], %s1862
          %s1864 = sand.u32 %s363, 1
          %s1865 = smul.addr %s1864, 16
          %s1866 = scalar_lea.vmem [#allocation2], %s1865
          %1868 = dma.done %s1863, 256
        $region92: #{tpu_custom_call.1} parent=87 // pred_fallthru
          _
      $region88: #{tpu_custom_call.1} parent=5 // pred_fallthru
        _
    $region6: #{tpu_custom_call.1} parent=1 // loop_footer
      %s28 = sadd.s32 1, %s24
    $region7: #{tpu_custom_call.1} parent=1 // loop_footer_branch
      %23 = sbr.rel target = $region3
    $region8: #{tpu_custom_call.1} parent=1 // loop_exit
      _
    %1869 = vsyncpa [#allocation3], 1
    %s1870 = scalar_lea.sflag [#allocation3], 1
    %1871 = vsyncpa %s1870, 1

</llo_original>
